<compile_context>
chip_gen: v7x
topology: tpu7x:2x2x1
jax: 0.10.0
libtpu: 0.0.40
codegen_flags: <defaults>
</compile_context>

<pallas_src>
import jax
import jax.numpy as jnp
from jax.experimental import pallas as pl
from jax.experimental.pallas import tpu as pltpu

ITERATIONS = 5
LR_POS = 0.45
LR_SIZE = 0.4


def direct_vg_kernel(params_ref, yolo_ref, boxes_ref, sims_ref):
    """One (batch, lane-tile) grid step of progressive box adjustment.

    params_ref : SMEM (B, 2 + 4*M)   row b = [W, H, gt(m=0..M-1: x1,y1,x2,y2)]
    yolo_ref   : VMEM (4, L)         rows cx, cy, w, h (normalized yolo)
    boxes_ref  : VMEM (ITERATIONS+1, 4, L)
    sims_ref   : VMEM (ITERATIONS+1, M, L)
    where L = lane tile (multiple of 128).
    """
    b = pl.program_id(0)
    M = sims_ref.shape[1]
    L = yolo_ref.shape[-1]

    # Per-batch board scale (scalars from SMEM, broadcast at use).
    wb = params_ref[b, 0]
    hb = params_ref[b, 1]

    cx = yolo_ref[0:1, :]
    cy = yolo_ref[1:2, :]
    w = yolo_ref[2:3, :]
    h = yolo_ref[3:4, :]

    # Fused yolo -> pascal_voc conversion.
    x1 = (cx - 0.5 * w) * wb
    y1 = (cy - 0.5 * h) * hb
    x2 = (cx + 0.5 * w) * wb
    y2 = (cy + 0.5 * h) * hb

    # GT coordinates as (M, L) tiles: row m is the scalar params[b, 2+4m+c]
    # broadcast across the lane tile.  Built once per grid step (GT is
    # constant across iterations), so the one-time sublane pack is cheap.
    def gt_tile(c):
        rows = [
            jnp.full((1, L), params_ref[b, 2 + 4 * m + c], jnp.float32)
            for m in range(M)
        ]
        return jnp.concatenate(rows, axis=0)

    gx1 = gt_tile(0)
    gy1 = gt_tile(1)
    gx2 = gt_tile(2)
    gy2 = gt_tile(3)
    g_area = (gx2 - gx1) * (gy2 - gy1)

    def iou_of(bx1, by1, bx2, by2):
        """(M, L) IoU of the (1, L) box rows vs. all M GT boxes at once."""
        area_b = (bx2 - bx1) * (by2 - by1)                       # (1, L)
        iw = jnp.maximum(jnp.minimum(bx2, gx2) - jnp.maximum(bx1, gx1), 0.0)
        ih = jnp.maximum(jnp.minimum(by2, gy2) - jnp.maximum(by1, gy1), 0.0)
        inter = iw * ih                                          # (M, L)
        union = area_b + g_area - inter
        # Exact divide (not approx reciprocal) to keep 1e-4 parity with the
        # reference; degenerate zero-area pairs give NaN just like torch.
        return inter / union

    def store(idx, bx1, by1, bx2, by2, iou_tile):
        # Direct row stores (no sublane concatenate) + one (M, L) sims store.
        boxes_ref[idx, 0:1, :] = bx1
        boxes_ref[idx, 1:2, :] = by1
        boxes_ref[idx, 2:3, :] = bx2
        boxes_ref[idx, 3:4, :] = by2
        sims_ref[idx] = iou_tile

    # Iteration 0: initial boxes + their IoU (computed once, reused below).
    iou = iou_of(x1, y1, x2, y2)
    store(0, x1, y1, x2, y2, iou)

    for it in range(ITERATIONS):
        # First-occurrence argmax over the M GT rows via a compare/select
        # chain on rows sliced from the vectorized IoU tile (pure VPU;
        # strict '>' keeps the first maximum, matching torch.argmax).
        best_iou = iou[0:1, :]
        bgx1 = gx1[0:1, :]
        bgy1 = gy1[0:1, :]
        bgx2 = gx2[0:1, :]
        bgy2 = gy2[0:1, :]
        for m in range(1, M):
            take = iou[m:m + 1, :] > best_iou
            best_iou = jnp.where(take, iou[m:m + 1, :], best_iou)
            bgx1 = jnp.where(take, gx1[m:m + 1, :], bgx1)
            bgy1 = jnp.where(take, gy1[m:m + 1, :], bgy1)
            bgx2 = jnp.where(take, gx2[m:m + 1, :], bgx2)
            bgy2 = jnp.where(take, gy2[m:m + 1, :], bgy2)

        dcx = (bgx1 + bgx2 - x1 - x2) * 0.5
        dcy = (bgy1 + bgy2 - y1 - y2) * 0.5
        dsx = (bgx2 - bgx1) - (x2 - x1)
        dsy = (bgy2 - bgy1) - (y2 - y1)

        x1 = x1 + LR_POS * dcx
        y1 = y1 + LR_POS * dcy
        x2 = x2 + LR_POS * dcx + LR_SIZE * (dsx - dcx)
        y2 = y2 + LR_POS * dcy + LR_SIZE * (dsy - dcy)

        # IoU of the new box state: computed once, stored, and carried into
        # the next iteration's argmax (no duplicate IoU work).
        iou = iou_of(x1, y1, x2, y2)
        store(it + 1, x1, y1, x2, y2, iou)


def _lane_tile(n):
    """Lane tile: multiple of 128, in [128, 512]."""
    t = 128
    while t < 512 and t < n:
        t *= 2
    return t


@jax.jit
def direct_vg_forward(boxes_yolo, gt_pascal, board_hw):
    """DirectVG.forward.

    boxes_yolo : (B, N, 4) normalized yolo (cx, cy, w, h)
    gt_pascal  : (B, M, 4) pascal_voc ground-truth boxes
    board_hw   : (B, 2)    (H, W) per sample
    """
    B, N, _ = boxes_yolo.shape
    M = gt_pascal.shape[1]
    n_iters = ITERATIONS + 1

    boxes_yolo = boxes_yolo.astype(jnp.float32)
    gt_pascal = gt_pascal.astype(jnp.float32)
    board_hw_f = board_hw.astype(jnp.float32)

    # Lane-dense layout: coordinates on sublanes, proposals on lanes, padded
    # to a multiple of the lane tile (>=128).  Padding lanes are zero boxes
    # (degenerate, IoU 0 against any GT) and get sliced off afterward.
    tile_l = _lane_tile(N)
    n_pad = ((N + tile_l - 1) // tile_l) * tile_l
    yolo_t = boxes_yolo.transpose(0, 2, 1)                      # (B, 4, N)
    yolo_t = jnp.pad(yolo_t, ((0, 0), (0, 0), (0, n_pad - N)))  # (B, 4, n_pad)

    # Tiny per-batch SMEM table: [W, H, gt flattened].  No N-fold broadcast.
    params = jnp.concatenate(
        [board_hw_f[:, ::-1], gt_pascal.reshape(B, 4 * M)], axis=1)  # (B, 2+4M)

    boxes_t, sims_t = pl.pallas_call(
        direct_vg_kernel,
        out_shape=(
            jax.ShapeDtypeStruct((B, n_iters, 4, n_pad), jnp.float32),
            jax.ShapeDtypeStruct((B, n_iters, M, n_pad), jnp.float32),
        ),
        grid_spec=pltpu.PrefetchScalarGridSpec(
            num_scalar_prefetch=0,
            grid=(B, n_pad // tile_l),
            in_specs=[
                pl.BlockSpec(memory_space=pltpu.MemorySpace.SMEM),
                pl.BlockSpec((None, 4, tile_l), lambda b, l: (b, 0, l)),
            ],
            out_specs=[
                pl.BlockSpec((None, n_iters, 4, tile_l),
                             lambda b, l: (b, 0, 0, l)),
                pl.BlockSpec((None, n_iters, M, tile_l),
                             lambda b, l: (b, 0, 0, l)),
            ],
        ),
        compiler_params=pltpu.CompilerParams(
            dimension_semantics=("parallel", "parallel")),
    )(params, yolo_t)

    # Back to the reference layout (layout plumbing only).
    prog_boxes = boxes_t[:, :, :, :N].transpose(0, 1, 3, 2)   # (B, it, N, 4)
    prog_sims = sims_t[:, :, :, :N].transpose(0, 1, 3, 2)     # (B, it, N, M)

    # board_hw is constant across iterations (reference just re-records it).
    prog_board_hws = jnp.tile(board_hw_f[:, None, :], (1, n_iters, 1))
    return prog_boxes, prog_sims, prog_board_hws


def _reference_forward(boxes_yolo, gt_pascal, board_hw):
    """Pure-JAX reference of the same math, for a sanity check."""
    H = board_hw[:, 0][:, None]
    W = board_hw[:, 1][:, None]
    cx, cy = boxes_yolo[..., 0], boxes_yolo[..., 1]
    w, h = boxes_yolo[..., 2], boxes_yolo[..., 3]
    b = jnp.stack([(cx - w * 0.5) * W, (cy - h * 0.5) * H,
                   (cx + w * 0.5) * W, (cy + h * 0.5) * H], axis=-1)

    def iou(bb, gg):  # bb:(B,N,4), gg:(B,M,4)
        lt = jnp.maximum(bb[:, :, None, :2], gg[:, None, :, :2])
        rb = jnp.minimum(bb[:, :, None, 2:], gg[:, None, :, 2:])
        wh = jnp.maximum(rb - lt, 0.0)
        inter = wh[..., 0] * wh[..., 1]
        ab = (bb[..., 2] - bb[..., 0]) * (bb[..., 3] - bb[..., 1])
        ag = (gg[..., 2] - gg[..., 0]) * (gg[..., 3] - gg[..., 1])
        return inter / (ab[:, :, None] + ag[:, None, :] - inter)

    all_b, all_s = [b], [iou(b, gt_pascal)]
    cur = b
    for _ in range(ITERATIONS):
        s = iou(cur, gt_pascal)
        best = jnp.argmax(s, axis=-1)                        # (B,N)
        gt_best = jnp.take_along_axis(
            gt_pascal, best[..., None].repeat(4, -1), axis=1)
        cc = (cur[..., :2] + cur[..., 2:]) * 0.5
        gc = (gt_best[..., :2] + gt_best[..., 2:]) * 0.5
        dc = gc - cc
        ds = (gt_best[..., 2:] - gt_best[..., :2]) - (cur[..., 2:] - cur[..., :2])
        xy1 = cur[..., :2] + LR_POS * dc
        xy2 = cur[..., 2:] + LR_POS * dc + LR_SIZE * ds - LR_SIZE * dc
        cur = jnp.concatenate([xy1, xy2], axis=-1)
        all_b.append(cur)
        all_s.append(iou(cur, gt_pascal))
    return jnp.stack(all_b, 1), jnp.stack(all_s, 1)


if __name__ == "__main__":
    key = jax.random.PRNGKey(0)
    k1, k2, k3, k4 = jax.random.split(key, 4)

    batch_size = 2
    n_phrases = 2
    n_proposals = 8          # total proposal boxes per sample
    n_gt = 3                 # ground-truth boxes per sample

    # Deterministic "random" proposal boxes in normalized yolo format.
    # TODO(synk): bbox_extension.generate_random_bboxes / torch.rand host glue
    # is reproduced deterministically with jax.random here.
    centers = jax.random.uniform(k1, (batch_size, n_proposals, 2),
                                 minval=0.25, maxval=0.75)
    sizes = jax.random.uniform(k2, (batch_size, n_proposals, 2),
                               minval=0.10, maxval=0.35)
    boxes_yolo = jnp.concatenate([centers, sizes], axis=-1).astype(jnp.float32)

    # Per-sample board sizes (H, W).
    board_hw = jnp.array([[32.0, 32.0], [48.0, 64.0]], dtype=jnp.float32)

    # Deterministic ground-truth boxes, pascal_voc, inside the board.
    gt_xy1 = jax.random.uniform(k3, (batch_size, n_gt, 2),
                                minval=0.05, maxval=0.45)
    gt_wh = jax.random.uniform(k4, (batch_size, n_gt, 2),
                               minval=0.15, maxval=0.45)
    scale = board_hw[:, None, ::-1]  # (B,1,2) -> (W,H) for (x,y)
    gt_pascal = jnp.concatenate(
        [gt_xy1 * scale, (gt_xy1 + gt_wh) * scale], axis=-1).astype(jnp.float32)

    prog_boxes, prog_sims, prog_hws = direct_vg_forward(
        boxes_yolo, gt_pascal, board_hw)
    jax.block_until_ready((prog_boxes, prog_sims, prog_hws))

    ref_boxes, ref_sims = _reference_forward(boxes_yolo, gt_pascal, board_hw)
    assert prog_boxes.shape == (batch_size, ITERATIONS + 1, n_proposals, 4)
    assert prog_sims.shape == (batch_size, ITERATIONS + 1, n_proposals, n_gt)
    assert prog_hws.shape == (batch_size, ITERATIONS + 1, 2)
    assert jnp.allclose(prog_boxes, ref_boxes, atol=1e-4, rtol=1e-4)
    assert jnp.allclose(prog_sims, ref_sims, atol=1e-4, rtol=1e-4)

    print("KERNEL_OK")
</pallas_src>

<mosaic_0001>
module attributes {stable_mosaic.version = 11 : i64} {
  func.func @direct_vg_kernel(%arg0: i32, %arg1: i32, %arg2: memref<2x14xf32, #tpu.memory_space<smem>>, %arg3: memref<1x4x128xf32, #tpu.memory_space<vmem>>, %arg4: memref<1x6x4x128xf32, #tpu.memory_space<vmem>>, %arg5: memref<1x6x3x128xf32, #tpu.memory_space<vmem>>) attributes {dimension_semantics = [#tpu.dimension_semantics<parallel>, #tpu.dimension_semantics<parallel>], iteration_bounds = array<i64: 2, 1>, scalar_prefetch = 0 : i64, scratch_operands = 0 : i64, tpu.core_type = #tpu.core_type<tc>, window_params = [{transform_indices = @transform_0, window_bounds = array<i64: 2, 14>}, {transform_indices = @transform_1, window_bounds = array<i64: 1, 4, 128>}, {transform_indices = @transform_2, window_bounds = array<i64: 1, 6, 4, 128>}, {transform_indices = @transform_3, window_bounds = array<i64: 1, 6, 3, 128>}]} {
    %0 = arith.index_cast %arg0 : i32 to index
    %c0 = arith.constant 0 : index
    %1 = memref.load %arg2[%0, %c0] : memref<2x14xf32, #tpu.memory_space<smem>>
    %2 = arith.index_cast %arg0 : i32 to index
    %c1 = arith.constant 1 : index
    %3 = memref.load %arg2[%2, %c1] : memref<2x14xf32, #tpu.memory_space<smem>>
    %c0_0 = arith.constant 0 : index
    %c0_1 = arith.constant 0 : index
    %c0_2 = arith.constant 0 : index
    %4 = vector.load %arg3[%c0_0, %c0_1, %c0_2] : memref<1x4x128xf32, #tpu.memory_space<vmem>>, vector<1x1x128xf32>
    %5 = vector.shape_cast %4 : vector<1x1x128xf32> to vector<1x128xf32>
    %c0_3 = arith.constant 0 : index
    %c1_4 = arith.constant 1 : index
    %c0_5 = arith.constant 0 : index
    %6 = vector.load %arg3[%c0_3, %c1_4, %c0_5] : memref<1x4x128xf32, #tpu.memory_space<vmem>>, vector<1x1x128xf32>
    %7 = vector.shape_cast %6 : vector<1x1x128xf32> to vector<1x128xf32>
    %c0_6 = arith.constant 0 : index
    %c2 = arith.constant 2 : index
    %c0_7 = arith.constant 0 : index
    %8 = vector.load %arg3[%c0_6, %c2, %c0_7] : memref<1x4x128xf32, #tpu.memory_space<vmem>>, vector<1x1x128xf32>
    %9 = vector.shape_cast %8 : vector<1x1x128xf32> to vector<1x128xf32>
    %c0_8 = arith.constant 0 : index
    %c3 = arith.constant 3 : index
    %c0_9 = arith.constant 0 : index
    %10 = vector.load %arg3[%c0_8, %c3, %c0_9] : memref<1x4x128xf32, #tpu.memory_space<vmem>>, vector<1x1x128xf32>
    %11 = vector.shape_cast %10 : vector<1x1x128xf32> to vector<1x128xf32>
    %cst = arith.constant 5.000000e-01 : f32
    %12 = vector.broadcast %cst : f32 to vector<1x128xf32>
    %13 = arith.mulf %12, %9 : vector<1x128xf32>
    %14 = arith.subf %5, %13 : vector<1x128xf32>
    %15 = vector.broadcast %1 : f32 to vector<1x128xf32>
    %16 = arith.mulf %14, %15 : vector<1x128xf32>
    %cst_10 = arith.constant 5.000000e-01 : f32
    %17 = vector.broadcast %cst_10 : f32 to vector<1x128xf32>
    %18 = arith.mulf %17, %11 : vector<1x128xf32>
    %19 = arith.subf %7, %18 : vector<1x128xf32>
    %20 = vector.broadcast %3 : f32 to vector<1x128xf32>
    %21 = arith.mulf %19, %20 : vector<1x128xf32>
    %cst_11 = arith.constant 5.000000e-01 : f32
    %22 = vector.broadcast %cst_11 : f32 to vector<1x128xf32>
    %23 = arith.mulf %22, %9 : vector<1x128xf32>
    %24 = arith.addf %5, %23 : vector<1x128xf32>
    %25 = vector.broadcast %1 : f32 to vector<1x128xf32>
    %26 = arith.mulf %24, %25 : vector<1x128xf32>
    %cst_12 = arith.constant 5.000000e-01 : f32
    %27 = vector.broadcast %cst_12 : f32 to vector<1x128xf32>
    %28 = arith.mulf %27, %11 : vector<1x128xf32>
    %29 = arith.addf %7, %28 : vector<1x128xf32>
    %30 = vector.broadcast %3 : f32 to vector<1x128xf32>
    %31 = arith.mulf %29, %30 : vector<1x128xf32>
    %32 = arith.index_cast %arg0 : i32 to index
    %c2_13 = arith.constant 2 : index
    %33 = memref.load %arg2[%32, %c2_13] : memref<2x14xf32, #tpu.memory_space<smem>>
    %34 = vector.broadcast %33 : f32 to vector<1x128xf32>
    %35 = arith.index_cast %arg0 : i32 to index
    %c6 = arith.constant 6 : index
    %36 = memref.load %arg2[%35, %c6] : memref<2x14xf32, #tpu.memory_space<smem>>
    %37 = vector.broadcast %36 : f32 to vector<1x128xf32>
    %38 = arith.index_cast %arg0 : i32 to index
    %c10 = arith.constant 10 : index
    %39 = memref.load %arg2[%38, %c10] : memref<2x14xf32, #tpu.memory_space<smem>>
    %40 = vector.broadcast %39 : f32 to vector<1x128xf32>
    %41 = tpu.concatenate %34, %37, %40 in 0 : vector<1x128xf32>, vector<1x128xf32>, vector<1x128xf32> -> vector<3x128xf32>
    %42 = arith.index_cast %arg0 : i32 to index
    %c3_14 = arith.constant 3 : index
    %43 = memref.load %arg2[%42, %c3_14] : memref<2x14xf32, #tpu.memory_space<smem>>
    %44 = vector.broadcast %43 : f32 to vector<1x128xf32>
    %45 = arith.index_cast %arg0 : i32 to index
    %c7 = arith.constant 7 : index
    %46 = memref.load %arg2[%45, %c7] : memref<2x14xf32, #tpu.memory_space<smem>>
    %47 = vector.broadcast %46 : f32 to vector<1x128xf32>
    %48 = arith.index_cast %arg0 : i32 to index
    %c11 = arith.constant 11 : index
    %49 = memref.load %arg2[%48, %c11] : memref<2x14xf32, #tpu.memory_space<smem>>
    %50 = vector.broadcast %49 : f32 to vector<1x128xf32>
    %51 = tpu.concatenate %44, %47, %50 in 0 : vector<1x128xf32>, vector<1x128xf32>, vector<1x128xf32> -> vector<3x128xf32>
    %52 = arith.index_cast %arg0 : i32 to index
    %c4 = arith.constant 4 : index
    %53 = memref.load %arg2[%52, %c4] : memref<2x14xf32, #tpu.memory_space<smem>>
    %54 = vector.broadcast %53 : f32 to vector<1x128xf32>
    %55 = arith.index_cast %arg0 : i32 to index
    %c8 = arith.constant 8 : index
    %56 = memref.load %arg2[%55, %c8] : memref<2x14xf32, #tpu.memory_space<smem>>
    %57 = vector.broadcast %56 : f32 to vector<1x128xf32>
    %58 = arith.index_cast %arg0 : i32 to index
    %c12 = arith.constant 12 : index
    %59 = memref.load %arg2[%58, %c12] : memref<2x14xf32, #tpu.memory_space<smem>>
    %60 = vector.broadcast %59 : f32 to vector<1x128xf32>
    %61 = tpu.concatenate %54, %57, %60 in 0 : vector<1x128xf32>, vector<1x128xf32>, vector<1x128xf32> -> vector<3x128xf32>
    %62 = arith.index_cast %arg0 : i32 to index
    %c5 = arith.constant 5 : index
    %63 = memref.load %arg2[%62, %c5] : memref<2x14xf32, #tpu.memory_space<smem>>
    %64 = vector.broadcast %63 : f32 to vector<1x128xf32>
    %65 = arith.index_cast %arg0 : i32 to index
    %c9 = arith.constant 9 : index
    %66 = memref.load %arg2[%65, %c9] : memref<2x14xf32, #tpu.memory_space<smem>>
    %67 = vector.broadcast %66 : f32 to vector<1x128xf32>
    %68 = arith.index_cast %arg0 : i32 to index
    %c13 = arith.constant 13 : index
    %69 = memref.load %arg2[%68, %c13] : memref<2x14xf32, #tpu.memory_space<smem>>
    %70 = vector.broadcast %69 : f32 to vector<1x128xf32>
    %71 = tpu.concatenate %64, %67, %70 in 0 : vector<1x128xf32>, vector<1x128xf32>, vector<1x128xf32> -> vector<3x128xf32>
    %72 = arith.subf %61, %41 : vector<3x128xf32>
    %73 = arith.subf %71, %51 : vector<3x128xf32>
    %74 = arith.mulf %72, %73 : vector<3x128xf32>
    %75 = arith.subf %26, %16 : vector<1x128xf32>
    %76 = arith.subf %31, %21 : vector<1x128xf32>
    %77 = arith.mulf %75, %76 : vector<1x128xf32>
    %78 = vector.broadcast %26 : vector<1x128xf32> to vector<3x128xf32>
    %79 = arith.minimumf %78, %61 : vector<3x128xf32>
    %80 = vector.broadcast %16 : vector<1x128xf32> to vector<3x128xf32>
    %81 = arith.maximumf %80, %41 : vector<3x128xf32>
    %82 = arith.subf %79, %81 : vector<3x128xf32>
    %cst_15 = arith.constant 0.000000e+00 : f32
    %83 = vector.broadcast %cst_15 : f32 to vector<3x128xf32>
    %84 = arith.maximumf %82, %83 : vector<3x128xf32>
    %85 = vector.broadcast %31 : vector<1x128xf32> to vector<3x128xf32>
    %86 = arith.minimumf %85, %71 : vector<3x128xf32>
    %87 = vector.broadcast %21 : vector<1x128xf32> to vector<3x128xf32>
    %88 = arith.maximumf %87, %51 : vector<3x128xf32>
    %89 = arith.subf %86, %88 : vector<3x128xf32>
    %cst_16 = arith.constant 0.000000e+00 : f32
    %90 = vector.broadcast %cst_16 : f32 to vector<3x128xf32>
    %91 = arith.maximumf %89, %90 : vector<3x128xf32>
    %92 = arith.mulf %84, %91 : vector<3x128xf32>
    %93 = vector.broadcast %77 : vector<1x128xf32> to vector<3x128xf32>
    %94 = arith.addf %93, %74 : vector<3x128xf32>
    %95 = arith.subf %94, %92 : vector<3x128xf32>
    %96 = arith.divf %92, %95 : vector<3x128xf32>
    %c0_17 = arith.constant 0 : index
    %c0_18 = arith.constant 0 : index
    %c0_19 = arith.constant 0 : index
    %c0_20 = arith.constant 0 : index
    %97 = vector.load %arg4[%c0_17, %c0_18, %c0_19, %c0_20] : memref<1x6x4x128xf32, #tpu.memory_space<vmem>>, vector<1x1x1x128xf32>
    %98 = vector.shape_cast %97 : vector<1x1x1x128xf32> to vector<1x128xf32>
    %99 = vector.shape_cast %16 : vector<1x128xf32> to vector<1x1x1x128xf32>
    tpu.vector_store %arg4[%c0_17, %c0_18, %c0_19, %c0_20], %99 {strides = array<i32>} : memref<1x6x4x128xf32, #tpu.memory_space<vmem>>, vector<1x1x1x128xf32>,
    %c0_21 = arith.constant 0 : index
    %c0_22 = arith.constant 0 : index
    %c1_23 = arith.constant 1 : index
    %c0_24 = arith.constant 0 : index
    %100 = vector.load %arg4[%c0_21, %c0_22, %c1_23, %c0_24] : memref<1x6x4x128xf32, #tpu.memory_space<vmem>>, vector<1x1x1x128xf32>
    %101 = vector.shape_cast %100 : vector<1x1x1x128xf32> to vector<1x128xf32>
    %102 = vector.shape_cast %21 : vector<1x128xf32> to vector<1x1x1x128xf32>
    tpu.vector_store %arg4[%c0_21, %c0_22, %c1_23, %c0_24], %102 {strides = array<i32>} : memref<1x6x4x128xf32, #tpu.memory_space<vmem>>, vector<1x1x1x128xf32>,
    %c0_25 = arith.constant 0 : index
    %c0_26 = arith.constant 0 : index
    %c2_27 = arith.constant 2 : index
    %c0_28 = arith.constant 0 : index
    %103 = vector.load %arg4[%c0_25, %c0_26, %c2_27, %c0_28] : memref<1x6x4x128xf32, #tpu.memory_space<vmem>>, vector<1x1x1x128xf32>
    %104 = vector.shape_cast %103 : vector<1x1x1x128xf32> to vector<1x128xf32>
    %105 = vector.shape_cast %26 : vector<1x128xf32> to vector<1x1x1x128xf32>
    tpu.vector_store %arg4[%c0_25, %c0_26, %c2_27, %c0_28], %105 {strides = array<i32>} : memref<1x6x4x128xf32, #tpu.memory_space<vmem>>, vector<1x1x1x128xf32>,
    %c0_29 = arith.constant 0 : index
    %c0_30 = arith.constant 0 : index
    %c3_31 = arith.constant 3 : index
    %c0_32 = arith.constant 0 : index
    %106 = vector.load %arg4[%c0_29, %c0_30, %c3_31, %c0_32] : memref<1x6x4x128xf32, #tpu.memory_space<vmem>>, vector<1x1x1x128xf32>
    %107 = vector.shape_cast %106 : vector<1x1x1x128xf32> to vector<1x128xf32>
    %108 = vector.shape_cast %31 : vector<1x128xf32> to vector<1x1x1x128xf32>
    tpu.vector_store %arg4[%c0_29, %c0_30, %c3_31, %c0_32], %108 {strides = array<i32>} : memref<1x6x4x128xf32, #tpu.memory_space<vmem>>, vector<1x1x1x128xf32>,
    %c0_33 = arith.constant 0 : index
    %c0_34 = arith.constant 0 : index
    %c0_35 = arith.constant 0 : index
    %c0_36 = arith.constant 0 : index
    %109 = vector.load %arg5[%c0_33, %c0_34, %c0_35, %c0_36] : memref<1x6x3x128xf32, #tpu.memory_space<vmem>>, vector<1x1x3x128xf32>
    %110 = vector.shape_cast %109 : vector<1x1x3x128xf32> to vector<3x128xf32>
    %111 = vector.shape_cast %96 : vector<3x128xf32> to vector<1x1x3x128xf32>
    tpu.vector_store %arg5[%c0_33, %c0_34, %c0_35, %c0_36], %111 {strides = array<i32>} : memref<1x6x3x128xf32, #tpu.memory_space<vmem>>, vector<1x1x3x128xf32>,
    %112 = vector.extract_strided_slice %96 {offsets = [0, 0], sizes = [1, 128], strides = [1, 1]} : vector<3x128xf32> to vector<1x128xf32>
    %113 = vector.extract_strided_slice %41 {offsets = [0, 0], sizes = [1, 128], strides = [1, 1]} : vector<3x128xf32> to vector<1x128xf32>
    %114 = vector.extract_strided_slice %51 {offsets = [0, 0], sizes = [1, 128], strides = [1, 1]} : vector<3x128xf32> to vector<1x128xf32>
    %115 = vector.extract_strided_slice %61 {offsets = [0, 0], sizes = [1, 128], strides = [1, 1]} : vector<3x128xf32> to vector<1x128xf32>
    %116 = vector.extract_strided_slice %71 {offsets = [0, 0], sizes = [1, 128], strides = [1, 1]} : vector<3x128xf32> to vector<1x128xf32>
    %117 = vector.extract_strided_slice %96 {offsets = [1, 0], sizes = [1, 128], strides = [1, 1]} : vector<3x128xf32> to vector<1x128xf32>
    %118 = arith.cmpf ogt, %117, %112 : vector<1x128xf32>
    %119 = vector.extract_strided_slice %96 {offsets = [1, 0], sizes = [1, 128], strides = [1, 1]} : vector<3x128xf32> to vector<1x128xf32>
    %120 = arith.select %118, %119, %112 : vector<1x128xi1>, vector<1x128xf32>
    %121 = vector.extract_strided_slice %41 {offsets = [1, 0], sizes = [1, 128], strides = [1, 1]} : vector<3x128xf32> to vector<1x128xf32>
    %122 = arith.select %118, %121, %113 : vector<1x128xi1>, vector<1x128xf32>
    %123 = vector.extract_strided_slice %51 {offsets = [1, 0], sizes = [1, 128], strides = [1, 1]} : vector<3x128xf32> to vector<1x128xf32>
    %124 = arith.select %118, %123, %114 : vector<1x128xi1>, vector<1x128xf32>
    %125 = vector.extract_strided_slice %61 {offsets = [1, 0], sizes = [1, 128], strides = [1, 1]} : vector<3x128xf32> to vector<1x128xf32>
    %126 = arith.select %118, %125, %115 : vector<1x128xi1>, vector<1x128xf32>
    %127 = vector.extract_strided_slice %71 {offsets = [1, 0], sizes = [1, 128], strides = [1, 1]} : vector<3x128xf32> to vector<1x128xf32>
    %128 = arith.select %118, %127, %116 : vector<1x128xi1>, vector<1x128xf32>
    %129 = vector.extract_strided_slice %96 {offsets = [2, 0], sizes = [1, 128], strides = [1, 1]} : vector<3x128xf32> to vector<1x128xf32>
    %130 = arith.cmpf ogt, %129, %120 : vector<1x128xf32>
    %131 = vector.extract_strided_slice %41 {offsets = [2, 0], sizes = [1, 128], strides = [1, 1]} : vector<3x128xf32> to vector<1x128xf32>
    %132 = arith.select %130, %131, %122 : vector<1x128xi1>, vector<1x128xf32>
    %133 = vector.extract_strided_slice %51 {offsets = [2, 0], sizes = [1, 128], strides = [1, 1]} : vector<3x128xf32> to vector<1x128xf32>
    %134 = arith.select %130, %133, %124 : vector<1x128xi1>, vector<1x128xf32>
    %135 = vector.extract_strided_slice %61 {offsets = [2, 0], sizes = [1, 128], strides = [1, 1]} : vector<3x128xf32> to vector<1x128xf32>
    %136 = arith.select %130, %135, %126 : vector<1x128xi1>, vector<1x128xf32>
    %137 = vector.extract_strided_slice %71 {offsets = [2, 0], sizes = [1, 128], strides = [1, 1]} : vector<3x128xf32> to vector<1x128xf32>
    %138 = arith.select %130, %137, %128 : vector<1x128xi1>, vector<1x128xf32>
    %139 = arith.addf %132, %136 : vector<1x128xf32>
    %140 = arith.subf %139, %16 : vector<1x128xf32>
    %141 = arith.subf %140, %26 : vector<1x128xf32>
    %cst_37 = arith.constant 5.000000e-01 : f32
    %142 = vector.broadcast %cst_37 : f32 to vector<1x128xf32>
    %143 = arith.mulf %141, %142 : vector<1x128xf32>
    %144 = arith.addf %134, %138 : vector<1x128xf32>
    %145 = arith.subf %144, %21 : vector<1x128xf32>
    %146 = arith.subf %145, %31 : vector<1x128xf32>
    %cst_38 = arith.constant 5.000000e-01 : f32
    %147 = vector.broadcast %cst_38 : f32 to vector<1x128xf32>
    %148 = arith.mulf %146, %147 : vector<1x128xf32>
    %149 = arith.subf %136, %132 : vector<1x128xf32>
    %150 = arith.subf %26, %16 : vector<1x128xf32>
    %151 = arith.subf %149, %150 : vector<1x128xf32>
    %152 = arith.subf %138, %134 : vector<1x128xf32>
    %153 = arith.subf %31, %21 : vector<1x128xf32>
    %154 = arith.subf %152, %153 : vector<1x128xf32>
    %cst_39 = arith.constant 4.500000e-01 : f32
    %155 = vector.broadcast %cst_39 : f32 to vector<1x128xf32>
    %156 = arith.mulf %155, %143 : vector<1x128xf32>
    %157 = arith.addf %16, %156 : vector<1x128xf32>
    %cst_40 = arith.constant 4.500000e-01 : f32
    %158 = vector.broadcast %cst_40 : f32 to vector<1x128xf32>
    %159 = arith.mulf %158, %148 : vector<1x128xf32>
    %160 = arith.addf %21, %159 : vector<1x128xf32>
    %cst_41 = arith.constant 4.500000e-01 : f32
    %161 = vector.broadcast %cst_41 : f32 to vector<1x128xf32>
    %162 = arith.mulf %161, %143 : vector<1x128xf32>
    %163 = arith.addf %26, %162 : vector<1x128xf32>
    %164 = arith.subf %151, %143 : vector<1x128xf32>
    %cst_42 = arith.constant 4.000000e-01 : f32
    %165 = vector.broadcast %cst_42 : f32 to vector<1x128xf32>
    %166 = arith.mulf %165, %164 : vector<1x128xf32>
    %167 = arith.addf %163, %166 : vector<1x128xf32>
    %cst_43 = arith.constant 4.500000e-01 : f32
    %168 = vector.broadcast %cst_43 : f32 to vector<1x128xf32>
    %169 = arith.mulf %168, %148 : vector<1x128xf32>
    %170 = arith.addf %31, %169 : vector<1x128xf32>
    %171 = arith.subf %154, %148 : vector<1x128xf32>
    %cst_44 = arith.constant 4.000000e-01 : f32
    %172 = vector.broadcast %cst_44 : f32 to vector<1x128xf32>
    %173 = arith.mulf %172, %171 : vector<1x128xf32>
    %174 = arith.addf %170, %173 : vector<1x128xf32>
    %175 = arith.subf %167, %157 : vector<1x128xf32>
    %176 = arith.subf %174, %160 : vector<1x128xf32>
    %177 = arith.mulf %175, %176 : vector<1x128xf32>
    %178 = vector.broadcast %167 : vector<1x128xf32> to vector<3x128xf32>
    %179 = arith.minimumf %178, %61 : vector<3x128xf32>
    %180 = vector.broadcast %157 : vector<1x128xf32> to vector<3x128xf32>
    %181 = arith.maximumf %180, %41 : vector<3x128xf32>
    %182 = arith.subf %179, %181 : vector<3x128xf32>
    %cst_45 = arith.constant 0.000000e+00 : f32
    %183 = vector.broadcast %cst_45 : f32 to vector<3x128xf32>
    %184 = arith.maximumf %182, %183 : vector<3x128xf32>
    %185 = vector.broadcast %174 : vector<1x128xf32> to vector<3x128xf32>
    %186 = arith.minimumf %185, %71 : vector<3x128xf32>
    %187 = vector.broadcast %160 : vector<1x128xf32> to vector<3x128xf32>
    %188 = arith.maximumf %187, %51 : vector<3x128xf32>
    %189 = arith.subf %186, %188 : vector<3x128xf32>
    %cst_46 = arith.constant 0.000000e+00 : f32
    %190 = vector.broadcast %cst_46 : f32 to vector<3x128xf32>
    %191 = arith.maximumf %189, %190 : vector<3x128xf32>
    %192 = arith.mulf %184, %191 : vector<3x128xf32>
    %193 = vector.broadcast %177 : vector<1x128xf32> to vector<3x128xf32>
    %194 = arith.addf %193, %74 : vector<3x128xf32>
    %195 = arith.subf %194, %192 : vector<3x128xf32>
    %196 = arith.divf %192, %195 : vector<3x128xf32>
    %c0_47 = arith.constant 0 : index
    %c1_48 = arith.constant 1 : index
    %c0_49 = arith.constant 0 : index
    %c0_50 = arith.constant 0 : index
    %197 = vector.load %arg4[%c0_47, %c1_48, %c0_49, %c0_50] : memref<1x6x4x128xf32, #tpu.memory_space<vmem>>, vector<1x1x1x128xf32>
    %198 = vector.shape_cast %197 : vector<1x1x1x128xf32> to vector<1x128xf32>
    %199 = vector.shape_cast %157 : vector<1x128xf32> to vector<1x1x1x128xf32>
    tpu.vector_store %arg4[%c0_47, %c1_48, %c0_49, %c0_50], %199 {strides = array<i32>} : memref<1x6x4x128xf32, #tpu.memory_space<vmem>>, vector<1x1x1x128xf32>,
    %c0_51 = arith.constant 0 : index
    %c1_52 = arith.constant 1 : index
    %c1_53 = arith.constant 1 : index
    %c0_54 = arith.constant 0 : index
    %200 = vector.load %arg4[%c0_51, %c1_52, %c1_53, %c0_54] : memref<1x6x4x128xf32, #tpu.memory_space<vmem>>, vector<1x1x1x128xf32>
    %201 = vector.shape_cast %200 : vector<1x1x1x128xf32> to vector<1x128xf32>
    %202 = vector.shape_cast %160 : vector<1x128xf32> to vector<1x1x1x128xf32>
    tpu.vector_store %arg4[%c0_51, %c1_52, %c1_53, %c0_54], %202 {strides = array<i32>} : memref<1x6x4x128xf32, #tpu.memory_space<vmem>>, vector<1x1x1x128xf32>,
    %c0_55 = arith.constant 0 : index
    %c1_56 = arith.constant 1 : index
    %c2_57 = arith.constant 2 : index
    %c0_58 = arith.constant 0 : index
    %203 = vector.load %arg4[%c0_55, %c1_56, %c2_57, %c0_58] : memref<1x6x4x128xf32, #tpu.memory_space<vmem>>, vector<1x1x1x128xf32>
    %204 = vector.shape_cast %203 : vector<1x1x1x128xf32> to vector<1x128xf32>
    %205 = vector.shape_cast %167 : vector<1x128xf32> to vector<1x1x1x128xf32>
    tpu.vector_store %arg4[%c0_55, %c1_56, %c2_57, %c0_58], %205 {strides = array<i32>} : memref<1x6x4x128xf32, #tpu.memory_space<vmem>>, vector<1x1x1x128xf32>,
    %c0_59 = arith.constant 0 : index
    %c1_60 = arith.constant 1 : index
    %c3_61 = arith.constant 3 : index
    %c0_62 = arith.constant 0 : index
    %206 = vector.load %arg4[%c0_59, %c1_60, %c3_61, %c0_62] : memref<1x6x4x128xf32, #tpu.memory_space<vmem>>, vector<1x1x1x128xf32>
    %207 = vector.shape_cast %206 : vector<1x1x1x128xf32> to vector<1x128xf32>
    %208 = vector.shape_cast %174 : vector<1x128xf32> to vector<1x1x1x128xf32>
    tpu.vector_store %arg4[%c0_59, %c1_60, %c3_61, %c0_62], %208 {strides = array<i32>} : memref<1x6x4x128xf32, #tpu.memory_space<vmem>>, vector<1x1x1x128xf32>,
    %c0_63 = arith.constant 0 : index
    %c1_64 = arith.constant 1 : index
    %c0_65 = arith.constant 0 : index
    %c0_66 = arith.constant 0 : index
    %209 = vector.load %arg5[%c0_63, %c1_64, %c0_65, %c0_66] : memref<1x6x3x128xf32, #tpu.memory_space<vmem>>, vector<1x1x3x128xf32>
    %210 = vector.shape_cast %209 : vector<1x1x3x128xf32> to vector<3x128xf32>
    %211 = vector.shape_cast %196 : vector<3x128xf32> to vector<1x1x3x128xf32>
    tpu.vector_store %arg5[%c0_63, %c1_64, %c0_65, %c0_66], %211 {strides = array<i32>} : memref<1x6x3x128xf32, #tpu.memory_space<vmem>>, vector<1x1x3x128xf32>,
    %212 = vector.extract_strided_slice %196 {offsets = [0, 0], sizes = [1, 128], strides = [1, 1]} : vector<3x128xf32> to vector<1x128xf32>
    %213 = vector.extract_strided_slice %41 {offsets = [0, 0], sizes = [1, 128], strides = [1, 1]} : vector<3x128xf32> to vector<1x128xf32>
    %214 = vector.extract_strided_slice %51 {offsets = [0, 0], sizes = [1, 128], strides = [1, 1]} : vector<3x128xf32> to vector<1x128xf32>
    %215 = vector.extract_strided_slice %61 {offsets = [0, 0], sizes = [1, 128], strides = [1, 1]} : vector<3x128xf32> to vector<1x128xf32>
    %216 = vector.extract_strided_slice %71 {offsets = [0, 0], sizes = [1, 128], strides = [1, 1]} : vector<3x128xf32> to vector<1x128xf32>
    %217 = vector.extract_strided_slice %196 {offsets = [1, 0], sizes = [1, 128], strides = [1, 1]} : vector<3x128xf32> to vector<1x128xf32>
    %218 = arith.cmpf ogt, %217, %212 : vector<1x128xf32>
    %219 = vector.extract_strided_slice %196 {offsets = [1, 0], sizes = [1, 128], strides = [1, 1]} : vector<3x128xf32> to vector<1x128xf32>
    %220 = arith.select %218, %219, %212 : vector<1x128xi1>, vector<1x128xf32>
    %221 = vector.extract_strided_slice %41 {offsets = [1, 0], sizes = [1, 128], strides = [1, 1]} : vector<3x128xf32> to vector<1x128xf32>
    %222 = arith.select %218, %221, %213 : vector<1x128xi1>, vector<1x128xf32>
    %223 = vector.extract_strided_slice %51 {offsets = [1, 0], sizes = [1, 128], strides = [1, 1]} : vector<3x128xf32> to vector<1x128xf32>
    %224 = arith.select %218, %223, %214 : vector<1x128xi1>, vector<1x128xf32>
    %225 = vector.extract_strided_slice %61 {offsets = [1, 0], sizes = [1, 128], strides = [1, 1]} : vector<3x128xf32> to vector<1x128xf32>
    %226 = arith.select %218, %225, %215 : vector<1x128xi1>, vector<1x128xf32>
    %227 = vector.extract_strided_slice %71 {offsets = [1, 0], sizes = [1, 128], strides = [1, 1]} : vector<3x128xf32> to vector<1x128xf32>
    %228 = arith.select %218, %227, %216 : vector<1x128xi1>, vector<1x128xf32>
    %229 = vector.extract_strided_slice %196 {offsets = [2, 0], sizes = [1, 128], strides = [1, 1]} : vector<3x128xf32> to vector<1x128xf32>
    %230 = arith.cmpf ogt, %229, %220 : vector<1x128xf32>
    %231 = vector.extract_strided_slice %41 {offsets = [2, 0], sizes = [1, 128], strides = [1, 1]} : vector<3x128xf32> to vector<1x128xf32>
    %232 = arith.select %230, %231, %222 : vector<1x128xi1>, vector<1x128xf32>
    %233 = vector.extract_strided_slice %51 {offsets = [2, 0], sizes = [1, 128], strides = [1, 1]} : vector<3x128xf32> to vector<1x128xf32>
    %234 = arith.select %230, %233, %224 : vector<1x128xi1>, vector<1x128xf32>
    %235 = vector.extract_strided_slice %61 {offsets = [2, 0], sizes = [1, 128], strides = [1, 1]} : vector<3x128xf32> to vector<1x128xf32>
    %236 = arith.select %230, %235, %226 : vector<1x128xi1>, vector<1x128xf32>
    %237 = vector.extract_strided_slice %71 {offsets = [2, 0], sizes = [1, 128], strides = [1, 1]} : vector<3x128xf32> to vector<1x128xf32>
    %238 = arith.select %230, %237, %228 : vector<1x128xi1>, vector<1x128xf32>
    %239 = arith.addf %232, %236 : vector<1x128xf32>
    %240 = arith.subf %239, %157 : vector<1x128xf32>
    %241 = arith.subf %240, %167 : vector<1x128xf32>
    %cst_67 = arith.constant 5.000000e-01 : f32
    %242 = vector.broadcast %cst_67 : f32 to vector<1x128xf32>
    %243 = arith.mulf %241, %242 : vector<1x128xf32>
    %244 = arith.addf %234, %238 : vector<1x128xf32>
    %245 = arith.subf %244, %160 : vector<1x128xf32>
    %246 = arith.subf %245, %174 : vector<1x128xf32>
    %cst_68 = arith.constant 5.000000e-01 : f32
    %247 = vector.broadcast %cst_68 : f32 to vector<1x128xf32>
    %248 = arith.mulf %246, %247 : vector<1x128xf32>
    %249 = arith.subf %236, %232 : vector<1x128xf32>
    %250 = arith.subf %167, %157 : vector<1x128xf32>
    %251 = arith.subf %249, %250 : vector<1x128xf32>
    %252 = arith.subf %238, %234 : vector<1x128xf32>
    %253 = arith.subf %174, %160 : vector<1x128xf32>
    %254 = arith.subf %252, %253 : vector<1x128xf32>
    %cst_69 = arith.constant 4.500000e-01 : f32
    %255 = vector.broadcast %cst_69 : f32 to vector<1x128xf32>
    %256 = arith.mulf %255, %243 : vector<1x128xf32>
    %257 = arith.addf %157, %256 : vector<1x128xf32>
    %cst_70 = arith.constant 4.500000e-01 : f32
    %258 = vector.broadcast %cst_70 : f32 to vector<1x128xf32>
    %259 = arith.mulf %258, %248 : vector<1x128xf32>
    %260 = arith.addf %160, %259 : vector<1x128xf32>
    %cst_71 = arith.constant 4.500000e-01 : f32
    %261 = vector.broadcast %cst_71 : f32 to vector<1x128xf32>
    %262 = arith.mulf %261, %243 : vector<1x128xf32>
    %263 = arith.addf %167, %262 : vector<1x128xf32>
    %264 = arith.subf %251, %243 : vector<1x128xf32>
    %cst_72 = arith.constant 4.000000e-01 : f32
    %265 = vector.broadcast %cst_72 : f32 to vector<1x128xf32>
    %266 = arith.mulf %265, %264 : vector<1x128xf32>
    %267 = arith.addf %263, %266 : vector<1x128xf32>
    %cst_73 = arith.constant 4.500000e-01 : f32
    %268 = vector.broadcast %cst_73 : f32 to vector<1x128xf32>
    %269 = arith.mulf %268, %248 : vector<1x128xf32>
    %270 = arith.addf %174, %269 : vector<1x128xf32>
    %271 = arith.subf %254, %248 : vector<1x128xf32>
    %cst_74 = arith.constant 4.000000e-01 : f32
    %272 = vector.broadcast %cst_74 : f32 to vector<1x128xf32>
    %273 = arith.mulf %272, %271 : vector<1x128xf32>
    %274 = arith.addf %270, %273 : vector<1x128xf32>
    %275 = arith.subf %267, %257 : vector<1x128xf32>
    %276 = arith.subf %274, %260 : vector<1x128xf32>
    %277 = arith.mulf %275, %276 : vector<1x128xf32>
    %278 = vector.broadcast %267 : vector<1x128xf32> to vector<3x128xf32>
    %279 = arith.minimumf %278, %61 : vector<3x128xf32>
    %280 = vector.broadcast %257 : vector<1x128xf32> to vector<3x128xf32>
    %281 = arith.maximumf %280, %41 : vector<3x128xf32>
    %282 = arith.subf %279, %281 : vector<3x128xf32>
    %cst_75 = arith.constant 0.000000e+00 : f32
    %283 = vector.broadcast %cst_75 : f32 to vector<3x128xf32>
    %284 = arith.maximumf %282, %283 : vector<3x128xf32>
    %285 = vector.broadcast %274 : vector<1x128xf32> to vector<3x128xf32>
    %286 = arith.minimumf %285, %71 : vector<3x128xf32>
    %287 = vector.broadcast %260 : vector<1x128xf32> to vector<3x128xf32>
    %288 = arith.maximumf %287, %51 : vector<3x128xf32>
    %289 = arith.subf %286, %288 : vector<3x128xf32>
    %cst_76 = arith.constant 0.000000e+00 : f32
    %290 = vector.broadcast %cst_76 : f32 to vector<3x128xf32>
    %291 = arith.maximumf %289, %290 : vector<3x128xf32>
    %292 = arith.mulf %284, %291 : vector<3x128xf32>
    %293 = vector.broadcast %277 : vector<1x128xf32> to vector<3x128xf32>
    %294 = arith.addf %293, %74 : vector<3x128xf32>
    %295 = arith.subf %294, %292 : vector<3x128xf32>
    %296 = arith.divf %292, %295 : vector<3x128xf32>
    %c0_77 = arith.constant 0 : index
    %c2_78 = arith.constant 2 : index
    %c0_79 = arith.constant 0 : index
    %c0_80 = arith.constant 0 : index
    %297 = vector.load %arg4[%c0_77, %c2_78, %c0_79, %c0_80] : memref<1x6x4x128xf32, #tpu.memory_space<vmem>>, vector<1x1x1x128xf32>
    %298 = vector.shape_cast %297 : vector<1x1x1x128xf32> to vector<1x128xf32>
    %299 = vector.shape_cast %257 : vector<1x128xf32> to vector<1x1x1x128xf32>
    tpu.vector_store %arg4[%c0_77, %c2_78, %c0_79, %c0_80], %299 {strides = array<i32>} : memref<1x6x4x128xf32, #tpu.memory_space<vmem>>, vector<1x1x1x128xf32>,
    %c0_81 = arith.constant 0 : index
    %c2_82 = arith.constant 2 : index
    %c1_83 = arith.constant 1 : index
    %c0_84 = arith.constant 0 : index
    %300 = vector.load %arg4[%c0_81, %c2_82, %c1_83, %c0_84] : memref<1x6x4x128xf32, #tpu.memory_space<vmem>>, vector<1x1x1x128xf32>
    %301 = vector.shape_cast %300 : vector<1x1x1x128xf32> to vector<1x128xf32>
    %302 = vector.shape_cast %260 : vector<1x128xf32> to vector<1x1x1x128xf32>
    tpu.vector_store %arg4[%c0_81, %c2_82, %c1_83, %c0_84], %302 {strides = array<i32>} : memref<1x6x4x128xf32, #tpu.memory_space<vmem>>, vector<1x1x1x128xf32>,
    %c0_85 = arith.constant 0 : index
    %c2_86 = arith.constant 2 : index
    %c2_87 = arith.constant 2 : index
    %c0_88 = arith.constant 0 : index
    %303 = vector.load %arg4[%c0_85, %c2_86, %c2_87, %c0_88] : memref<1x6x4x128xf32, #tpu.memory_space<vmem>>, vector<1x1x1x128xf32>
    %304 = vector.shape_cast %303 : vector<1x1x1x128xf32> to vector<1x128xf32>
    %305 = vector.shape_cast %267 : vector<1x128xf32> to vector<1x1x1x128xf32>
    tpu.vector_store %arg4[%c0_85, %c2_86, %c2_87, %c0_88], %305 {strides = array<i32>} : memref<1x6x4x128xf32, #tpu.memory_space<vmem>>, vector<1x1x1x128xf32>,
    %c0_89 = arith.constant 0 : index
    %c2_90 = arith.constant 2 : index
    %c3_91 = arith.constant 3 : index
    %c0_92 = arith.constant 0 : index
    %306 = vector.load %arg4[%c0_89, %c2_90, %c3_91, %c0_92] : memref<1x6x4x128xf32, #tpu.memory_space<vmem>>, vector<1x1x1x128xf32>
    %307 = vector.shape_cast %306 : vector<1x1x1x128xf32> to vector<1x128xf32>
    %308 = vector.shape_cast %274 : vector<1x128xf32> to vector<1x1x1x128xf32>
    tpu.vector_store %arg4[%c0_89, %c2_90, %c3_91, %c0_92], %308 {strides = array<i32>} : memref<1x6x4x128xf32, #tpu.memory_space<vmem>>, vector<1x1x1x128xf32>,
    %c0_93 = arith.constant 0 : index
    %c2_94 = arith.constant 2 : index
    %c0_95 = arith.constant 0 : index
    %c0_96 = arith.constant 0 : index
    %309 = vector.load %arg5[%c0_93, %c2_94, %c0_95, %c0_96] : memref<1x6x3x128xf32, #tpu.memory_space<vmem>>, vector<1x1x3x128xf32>
    %310 = vector.shape_cast %309 : vector<1x1x3x128xf32> to vector<3x128xf32>
    %311 = vector.shape_cast %296 : vector<3x128xf32> to vector<1x1x3x128xf32>
    tpu.vector_store %arg5[%c0_93, %c2_94, %c0_95, %c0_96], %311 {strides = array<i32>} : memref<1x6x3x128xf32, #tpu.memory_space<vmem>>, vector<1x1x3x128xf32>,
    %312 = vector.extract_strided_slice %296 {offsets = [0, 0], sizes = [1, 128], strides = [1, 1]} : vector<3x128xf32> to vector<1x128xf32>
    %313 = vector.extract_strided_slice %41 {offsets = [0, 0], sizes = [1, 128], strides = [1, 1]} : vector<3x128xf32> to vector<1x128xf32>
    %314 = vector.extract_strided_slice %51 {offsets = [0, 0], sizes = [1, 128], strides = [1, 1]} : vector<3x128xf32> to vector<1x128xf32>
    %315 = vector.extract_strided_slice %61 {offsets = [0, 0], sizes = [1, 128], strides = [1, 1]} : vector<3x128xf32> to vector<1x128xf32>
    %316 = vector.extract_strided_slice %71 {offsets = [0, 0], sizes = [1, 128], strides = [1, 1]} : vector<3x128xf32> to vector<1x128xf32>
    %317 = vector.extract_strided_slice %296 {offsets = [1, 0], sizes = [1, 128], strides = [1, 1]} : vector<3x128xf32> to vector<1x128xf32>
    %318 = arith.cmpf ogt, %317, %312 : vector<1x128xf32>
    %319 = vector.extract_strided_slice %296 {offsets = [1, 0], sizes = [1, 128], strides = [1, 1]} : vector<3x128xf32> to vector<1x128xf32>
    %320 = arith.select %318, %319, %312 : vector<1x128xi1>, vector<1x128xf32>
    %321 = vector.extract_strided_slice %41 {offsets = [1, 0], sizes = [1, 128], strides = [1, 1]} : vector<3x128xf32> to vector<1x128xf32>
    %322 = arith.select %318, %321, %313 : vector<1x128xi1>, vector<1x128xf32>
    %323 = vector.extract_strided_slice %51 {offsets = [1, 0], sizes = [1, 128], strides = [1, 1]} : vector<3x128xf32> to vector<1x128xf32>
    %324 = arith.select %318, %323, %314 : vector<1x128xi1>, vector<1x128xf32>
    %325 = vector.extract_strided_slice %61 {offsets = [1, 0], sizes = [1, 128], strides = [1, 1]} : vector<3x128xf32> to vector<1x128xf32>
    %326 = arith.select %318, %325, %315 : vector<1x128xi1>, vector<1x128xf32>
    %327 = vector.extract_strided_slice %71 {offsets = [1, 0], sizes = [1, 128], strides = [1, 1]} : vector<3x128xf32> to vector<1x128xf32>
    %328 = arith.select %318, %327, %316 : vector<1x128xi1>, vector<1x128xf32>
    %329 = vector.extract_strided_slice %296 {offsets = [2, 0], sizes = [1, 128], strides = [1, 1]} : vector<3x128xf32> to vector<1x128xf32>
    %330 = arith.cmpf ogt, %329, %320 : vector<1x128xf32>
    %331 = vector.extract_strided_slice %41 {offsets = [2, 0], sizes = [1, 128], strides = [1, 1]} : vector<3x128xf32> to vector<1x128xf32>
    %332 = arith.select %330, %331, %322 : vector<1x128xi1>, vector<1x128xf32>
    %333 = vector.extract_strided_slice %51 {offsets = [2, 0], sizes = [1, 128], strides = [1, 1]} : vector<3x128xf32> to vector<1x128xf32>
    %334 = arith.select %330, %333, %324 : vector<1x128xi1>, vector<1x128xf32>
    %335 = vector.extract_strided_slice %61 {offsets = [2, 0], sizes = [1, 128], strides = [1, 1]} : vector<3x128xf32> to vector<1x128xf32>
    %336 = arith.select %330, %335, %326 : vector<1x128xi1>, vector<1x128xf32>
    %337 = vector.extract_strided_slice %71 {offsets = [2, 0], sizes = [1, 128], strides = [1, 1]} : vector<3x128xf32> to vector<1x128xf32>
    %338 = arith.select %330, %337, %328 : vector<1x128xi1>, vector<1x128xf32>
    %339 = arith.addf %332, %336 : vector<1x128xf32>
    %340 = arith.subf %339, %257 : vector<1x128xf32>
    %341 = arith.subf %340, %267 : vector<1x128xf32>
    %cst_97 = arith.constant 5.000000e-01 : f32
    %342 = vector.broadcast %cst_97 : f32 to vector<1x128xf32>
    %343 = arith.mulf %341, %342 : vector<1x128xf32>
    %344 = arith.addf %334, %338 : vector<1x128xf32>
    %345 = arith.subf %344, %260 : vector<1x128xf32>
    %346 = arith.subf %345, %274 : vector<1x128xf32>
    %cst_98 = arith.constant 5.000000e-01 : f32
    %347 = vector.broadcast %cst_98 : f32 to vector<1x128xf32>
    %348 = arith.mulf %346, %347 : vector<1x128xf32>
    %349 = arith.subf %336, %332 : vector<1x128xf32>
    %350 = arith.subf %267, %257 : vector<1x128xf32>
    %351 = arith.subf %349, %350 : vector<1x128xf32>
    %352 = arith.subf %338, %334 : vector<1x128xf32>
    %353 = arith.subf %274, %260 : vector<1x128xf32>
    %354 = arith.subf %352, %353 : vector<1x128xf32>
    %cst_99 = arith.constant 4.500000e-01 : f32
    %355 = vector.broadcast %cst_99 : f32 to vector<1x128xf32>
    %356 = arith.mulf %355, %343 : vector<1x128xf32>
    %357 = arith.addf %257, %356 : vector<1x128xf32>
    %cst_100 = arith.constant 4.500000e-01 : f32
    %358 = vector.broadcast %cst_100 : f32 to vector<1x128xf32>
    %359 = arith.mulf %358, %348 : vector<1x128xf32>
    %360 = arith.addf %260, %359 : vector<1x128xf32>
    %cst_101 = arith.constant 4.500000e-01 : f32
    %361 = vector.broadcast %cst_101 : f32 to vector<1x128xf32>
    %362 = arith.mulf %361, %343 : vector<1x128xf32>
    %363 = arith.addf %267, %362 : vector<1x128xf32>
    %364 = arith.subf %351, %343 : vector<1x128xf32>
    %cst_102 = arith.constant 4.000000e-01 : f32
    %365 = vector.broadcast %cst_102 : f32 to vector<1x128xf32>
    %366 = arith.mulf %365, %364 : vector<1x128xf32>
    %367 = arith.addf %363, %366 : vector<1x128xf32>
    %cst_103 = arith.constant 4.500000e-01 : f32
    %368 = vector.broadcast %cst_103 : f32 to vector<1x128xf32>
    %369 = arith.mulf %368, %348 : vector<1x128xf32>
    %370 = arith.addf %274, %369 : vector<1x128xf32>
    %371 = arith.subf %354, %348 : vector<1x128xf32>
    %cst_104 = arith.constant 4.000000e-01 : f32
    %372 = vector.broadcast %cst_104 : f32 to vector<1x128xf32>
    %373 = arith.mulf %372, %371 : vector<1x128xf32>
    %374 = arith.addf %370, %373 : vector<1x128xf32>
    %375 = arith.subf %367, %357 : vector<1x128xf32>
    %376 = arith.subf %374, %360 : vector<1x128xf32>
    %377 = arith.mulf %375, %376 : vector<1x128xf32>
    %378 = vector.broadcast %367 : vector<1x128xf32> to vector<3x128xf32>
    %379 = arith.minimumf %378, %61 : vector<3x128xf32>
    %380 = vector.broadcast %357 : vector<1x128xf32> to vector<3x128xf32>
    %381 = arith.maximumf %380, %41 : vector<3x128xf32>
    %382 = arith.subf %379, %381 : vector<3x128xf32>
    %cst_105 = arith.constant 0.000000e+00 : f32
    %383 = vector.broadcast %cst_105 : f32 to vector<3x128xf32>
    %384 = arith.maximumf %382, %383 : vector<3x128xf32>
    %385 = vector.broadcast %374 : vector<1x128xf32> to vector<3x128xf32>
    %386 = arith.minimumf %385, %71 : vector<3x128xf32>
    %387 = vector.broadcast %360 : vector<1x128xf32> to vector<3x128xf32>
    %388 = arith.maximumf %387, %51 : vector<3x128xf32>
    %389 = arith.subf %386, %388 : vector<3x128xf32>
    %cst_106 = arith.constant 0.000000e+00 : f32
    %390 = vector.broadcast %cst_106 : f32 to vector<3x128xf32>
    %391 = arith.maximumf %389, %390 : vector<3x128xf32>
    %392 = arith.mulf %384, %391 : vector<3x128xf32>
    %393 = vector.broadcast %377 : vector<1x128xf32> to vector<3x128xf32>
    %394 = arith.addf %393, %74 : vector<3x128xf32>
    %395 = arith.subf %394, %392 : vector<3x128xf32>
    %396 = arith.divf %392, %395 : vector<3x128xf32>
    %c0_107 = arith.constant 0 : index
    %c3_108 = arith.constant 3 : index
    %c0_109 = arith.constant 0 : index
    %c0_110 = arith.constant 0 : index
    %397 = vector.load %arg4[%c0_107, %c3_108, %c0_109, %c0_110] : memref<1x6x4x128xf32, #tpu.memory_space<vmem>>, vector<1x1x1x128xf32>
    %398 = vector.shape_cast %397 : vector<1x1x1x128xf32> to vector<1x128xf32>
    %399 = vector.shape_cast %357 : vector<1x128xf32> to vector<1x1x1x128xf32>
    tpu.vector_store %arg4[%c0_107, %c3_108, %c0_109, %c0_110], %399 {strides = array<i32>} : memref<1x6x4x128xf32, #tpu.memory_space<vmem>>, vector<1x1x1x128xf32>,
    %c0_111 = arith.constant 0 : index
    %c3_112 = arith.constant 3 : index
    %c1_113 = arith.constant 1 : index
    %c0_114 = arith.constant 0 : index
    %400 = vector.load %arg4[%c0_111, %c3_112, %c1_113, %c0_114] : memref<1x6x4x128xf32, #tpu.memory_space<vmem>>, vector<1x1x1x128xf32>
    %401 = vector.shape_cast %400 : vector<1x1x1x128xf32> to vector<1x128xf32>
    %402 = vector.shape_cast %360 : vector<1x128xf32> to vector<1x1x1x128xf32>
    tpu.vector_store %arg4[%c0_111, %c3_112, %c1_113, %c0_114], %402 {strides = array<i32>} : memref<1x6x4x128xf32, #tpu.memory_space<vmem>>, vector<1x1x1x128xf32>,
    %c0_115 = arith.constant 0 : index
    %c3_116 = arith.constant 3 : index
    %c2_117 = arith.constant 2 : index
    %c0_118 = arith.constant 0 : index
    %403 = vector.load %arg4[%c0_115, %c3_116, %c2_117, %c0_118] : memref<1x6x4x128xf32, #tpu.memory_space<vmem>>, vector<1x1x1x128xf32>
    %404 = vector.shape_cast %403 : vector<1x1x1x128xf32> to vector<1x128xf32>
    %405 = vector.shape_cast %367 : vector<1x128xf32> to vector<1x1x1x128xf32>
    tpu.vector_store %arg4[%c0_115, %c3_116, %c2_117, %c0_118], %405 {strides = array<i32>} : memref<1x6x4x128xf32, #tpu.memory_space<vmem>>, vector<1x1x1x128xf32>,
    %c0_119 = arith.constant 0 : index
    %c3_120 = arith.constant 3 : index
    %c3_121 = arith.constant 3 : index
    %c0_122 = arith.constant 0 : index
    %406 = vector.load %arg4[%c0_119, %c3_120, %c3_121, %c0_122] : memref<1x6x4x128xf32, #tpu.memory_space<vmem>>, vector<1x1x1x128xf32>
    %407 = vector.shape_cast %406 : vector<1x1x1x128xf32> to vector<1x128xf32>
    %408 = vector.shape_cast %374 : vector<1x128xf32> to vector<1x1x1x128xf32>
    tpu.vector_store %arg4[%c0_119, %c3_120, %c3_121, %c0_122], %408 {strides = array<i32>} : memref<1x6x4x128xf32, #tpu.memory_space<vmem>>, vector<1x1x1x128xf32>,
    %c0_123 = arith.constant 0 : index
    %c3_124 = arith.constant 3 : index
    %c0_125 = arith.constant 0 : index
    %c0_126 = arith.constant 0 : index
    %409 = vector.load %arg5[%c0_123, %c3_124, %c0_125, %c0_126] : memref<1x6x3x128xf32, #tpu.memory_space<vmem>>, vector<1x1x3x128xf32>
    %410 = vector.shape_cast %409 : vector<1x1x3x128xf32> to vector<3x128xf32>
    %411 = vector.shape_cast %396 : vector<3x128xf32> to vector<1x1x3x128xf32>
    tpu.vector_store %arg5[%c0_123, %c3_124, %c0_125, %c0_126], %411 {strides = array<i32>} : memref<1x6x3x128xf32, #tpu.memory_space<vmem>>, vector<1x1x3x128xf32>,
    %412 = vector.extract_strided_slice %396 {offsets = [0, 0], sizes = [1, 128], strides = [1, 1]} : vector<3x128xf32> to vector<1x128xf32>
    %413 = vector.extract_strided_slice %41 {offsets = [0, 0], sizes = [1, 128], strides = [1, 1]} : vector<3x128xf32> to vector<1x128xf32>
    %414 = vector.extract_strided_slice %51 {offsets = [0, 0], sizes = [1, 128], strides = [1, 1]} : vector<3x128xf32> to vector<1x128xf32>
    %415 = vector.extract_strided_slice %61 {offsets = [0, 0], sizes = [1, 128], strides = [1, 1]} : vector<3x128xf32> to vector<1x128xf32>
    %416 = vector.extract_strided_slice %71 {offsets = [0, 0], sizes = [1, 128], strides = [1, 1]} : vector<3x128xf32> to vector<1x128xf32>
    %417 = vector.extract_strided_slice %396 {offsets = [1, 0], sizes = [1, 128], strides = [1, 1]} : vector<3x128xf32> to vector<1x128xf32>
    %418 = arith.cmpf ogt, %417, %412 : vector<1x128xf32>
    %419 = vector.extract_strided_slice %396 {offsets = [1, 0], sizes = [1, 128], strides = [1, 1]} : vector<3x128xf32> to vector<1x128xf32>
    %420 = arith.select %418, %419, %412 : vector<1x128xi1>, vector<1x128xf32>
    %421 = vector.extract_strided_slice %41 {offsets = [1, 0], sizes = [1, 128], strides = [1, 1]} : vector<3x128xf32> to vector<1x128xf32>
    %422 = arith.select %418, %421, %413 : vector<1x128xi1>, vector<1x128xf32>
    %423 = vector.extract_strided_slice %51 {offsets = [1, 0], sizes = [1, 128], strides = [1, 1]} : vector<3x128xf32> to vector<1x128xf32>
    %424 = arith.select %418, %423, %414 : vector<1x128xi1>, vector<1x128xf32>
    %425 = vector.extract_strided_slice %61 {offsets = [1, 0], sizes = [1, 128], strides = [1, 1]} : vector<3x128xf32> to vector<1x128xf32>
    %426 = arith.select %418, %425, %415 : vector<1x128xi1>, vector<1x128xf32>
    %427 = vector.extract_strided_slice %71 {offsets = [1, 0], sizes = [1, 128], strides = [1, 1]} : vector<3x128xf32> to vector<1x128xf32>
    %428 = arith.select %418, %427, %416 : vector<1x128xi1>, vector<1x128xf32>
    %429 = vector.extract_strided_slice %396 {offsets = [2, 0], sizes = [1, 128], strides = [1, 1]} : vector<3x128xf32> to vector<1x128xf32>
    %430 = arith.cmpf ogt, %429, %420 : vector<1x128xf32>
    %431 = vector.extract_strided_slice %41 {offsets = [2, 0], sizes = [1, 128], strides = [1, 1]} : vector<3x128xf32> to vector<1x128xf32>
    %432 = arith.select %430, %431, %422 : vector<1x128xi1>, vector<1x128xf32>
    %433 = vector.extract_strided_slice %51 {offsets = [2, 0], sizes = [1, 128], strides = [1, 1]} : vector<3x128xf32> to vector<1x128xf32>
    %434 = arith.select %430, %433, %424 : vector<1x128xi1>, vector<1x128xf32>
    %435 = vector.extract_strided_slice %61 {offsets = [2, 0], sizes = [1, 128], strides = [1, 1]} : vector<3x128xf32> to vector<1x128xf32>
    %436 = arith.select %430, %435, %426 : vector<1x128xi1>, vector<1x128xf32>
    %437 = vector.extract_strided_slice %71 {offsets = [2, 0], sizes = [1, 128], strides = [1, 1]} : vector<3x128xf32> to vector<1x128xf32>
    %438 = arith.select %430, %437, %428 : vector<1x128xi1>, vector<1x128xf32>
    %439 = arith.addf %432, %436 : vector<1x128xf32>
    %440 = arith.subf %439, %357 : vector<1x128xf32>
    %441 = arith.subf %440, %367 : vector<1x128xf32>
    %cst_127 = arith.constant 5.000000e-01 : f32
    %442 = vector.broadcast %cst_127 : f32 to vector<1x128xf32>
    %443 = arith.mulf %441, %442 : vector<1x128xf32>
    %444 = arith.addf %434, %438 : vector<1x128xf32>
    %445 = arith.subf %444, %360 : vector<1x128xf32>
    %446 = arith.subf %445, %374 : vector<1x128xf32>
    %cst_128 = arith.constant 5.000000e-01 : f32
    %447 = vector.broadcast %cst_128 : f32 to vector<1x128xf32>
    %448 = arith.mulf %446, %447 : vector<1x128xf32>
    %449 = arith.subf %436, %432 : vector<1x128xf32>
    %450 = arith.subf %367, %357 : vector<1x128xf32>
    %451 = arith.subf %449, %450 : vector<1x128xf32>
    %452 = arith.subf %438, %434 : vector<1x128xf32>
    %453 = arith.subf %374, %360 : vector<1x128xf32>
    %454 = arith.subf %452, %453 : vector<1x128xf32>
    %cst_129 = arith.constant 4.500000e-01 : f32
    %455 = vector.broadcast %cst_129 : f32 to vector<1x128xf32>
    %456 = arith.mulf %455, %443 : vector<1x128xf32>
    %457 = arith.addf %357, %456 : vector<1x128xf32>
    %cst_130 = arith.constant 4.500000e-01 : f32
    %458 = vector.broadcast %cst_130 : f32 to vector<1x128xf32>
    %459 = arith.mulf %458, %448 : vector<1x128xf32>
    %460 = arith.addf %360, %459 : vector<1x128xf32>
    %cst_131 = arith.constant 4.500000e-01 : f32
    %461 = vector.broadcast %cst_131 : f32 to vector<1x128xf32>
    %462 = arith.mulf %461, %443 : vector<1x128xf32>
    %463 = arith.addf %367, %462 : vector<1x128xf32>
    %464 = arith.subf %451, %443 : vector<1x128xf32>
    %cst_132 = arith.constant 4.000000e-01 : f32
    %465 = vector.broadcast %cst_132 : f32 to vector<1x128xf32>
    %466 = arith.mulf %465, %464 : vector<1x128xf32>
    %467 = arith.addf %463, %466 : vector<1x128xf32>
    %cst_133 = arith.constant 4.500000e-01 : f32
    %468 = vector.broadcast %cst_133 : f32 to vector<1x128xf32>
    %469 = arith.mulf %468, %448 : vector<1x128xf32>
    %470 = arith.addf %374, %469 : vector<1x128xf32>
    %471 = arith.subf %454, %448 : vector<1x128xf32>
    %cst_134 = arith.constant 4.000000e-01 : f32
    %472 = vector.broadcast %cst_134 : f32 to vector<1x128xf32>
    %473 = arith.mulf %472, %471 : vector<1x128xf32>
    %474 = arith.addf %470, %473 : vector<1x128xf32>
    %475 = arith.subf %467, %457 : vector<1x128xf32>
    %476 = arith.subf %474, %460 : vector<1x128xf32>
    %477 = arith.mulf %475, %476 : vector<1x128xf32>
    %478 = vector.broadcast %467 : vector<1x128xf32> to vector<3x128xf32>
    %479 = arith.minimumf %478, %61 : vector<3x128xf32>
    %480 = vector.broadcast %457 : vector<1x128xf32> to vector<3x128xf32>
    %481 = arith.maximumf %480, %41 : vector<3x128xf32>
    %482 = arith.subf %479, %481 : vector<3x128xf32>
    %cst_135 = arith.constant 0.000000e+00 : f32
    %483 = vector.broadcast %cst_135 : f32 to vector<3x128xf32>
    %484 = arith.maximumf %482, %483 : vector<3x128xf32>
    %485 = vector.broadcast %474 : vector<1x128xf32> to vector<3x128xf32>
    %486 = arith.minimumf %485, %71 : vector<3x128xf32>
    %487 = vector.broadcast %460 : vector<1x128xf32> to vector<3x128xf32>
    %488 = arith.maximumf %487, %51 : vector<3x128xf32>
    %489 = arith.subf %486, %488 : vector<3x128xf32>
    %cst_136 = arith.constant 0.000000e+00 : f32
    %490 = vector.broadcast %cst_136 : f32 to vector<3x128xf32>
    %491 = arith.maximumf %489, %490 : vector<3x128xf32>
    %492 = arith.mulf %484, %491 : vector<3x128xf32>
    %493 = vector.broadcast %477 : vector<1x128xf32> to vector<3x128xf32>
    %494 = arith.addf %493, %74 : vector<3x128xf32>
    %495 = arith.subf %494, %492 : vector<3x128xf32>
    %496 = arith.divf %492, %495 : vector<3x128xf32>
    %c0_137 = arith.constant 0 : index
    %c4_138 = arith.constant 4 : index
    %c0_139 = arith.constant 0 : index
    %c0_140 = arith.constant 0 : index
    %497 = vector.load %arg4[%c0_137, %c4_138, %c0_139, %c0_140] : memref<1x6x4x128xf32, #tpu.memory_space<vmem>>, vector<1x1x1x128xf32>
    %498 = vector.shape_cast %497 : vector<1x1x1x128xf32> to vector<1x128xf32>
    %499 = vector.shape_cast %457 : vector<1x128xf32> to vector<1x1x1x128xf32>
    tpu.vector_store %arg4[%c0_137, %c4_138, %c0_139, %c0_140], %499 {strides = array<i32>} : memref<1x6x4x128xf32, #tpu.memory_space<vmem>>, vector<1x1x1x128xf32>,
    %c0_141 = arith.constant 0 : index
    %c4_142 = arith.constant 4 : index
    %c1_143 = arith.constant 1 : index
    %c0_144 = arith.constant 0 : index
    %500 = vector.load %arg4[%c0_141, %c4_142, %c1_143, %c0_144] : memref<1x6x4x128xf32, #tpu.memory_space<vmem>>, vector<1x1x1x128xf32>
    %501 = vector.shape_cast %500 : vector<1x1x1x128xf32> to vector<1x128xf32>
    %502 = vector.shape_cast %460 : vector<1x128xf32> to vector<1x1x1x128xf32>
    tpu.vector_store %arg4[%c0_141, %c4_142, %c1_143, %c0_144], %502 {strides = array<i32>} : memref<1x6x4x128xf32, #tpu.memory_space<vmem>>, vector<1x1x1x128xf32>,
    %c0_145 = arith.constant 0 : index
    %c4_146 = arith.constant 4 : index
    %c2_147 = arith.constant 2 : index
    %c0_148 = arith.constant 0 : index
    %503 = vector.load %arg4[%c0_145, %c4_146, %c2_147, %c0_148] : memref<1x6x4x128xf32, #tpu.memory_space<vmem>>, vector<1x1x1x128xf32>
    %504 = vector.shape_cast %503 : vector<1x1x1x128xf32> to vector<1x128xf32>
    %505 = vector.shape_cast %467 : vector<1x128xf32> to vector<1x1x1x128xf32>
    tpu.vector_store %arg4[%c0_145, %c4_146, %c2_147, %c0_148], %505 {strides = array<i32>} : memref<1x6x4x128xf32, #tpu.memory_space<vmem>>, vector<1x1x1x128xf32>,
    %c0_149 = arith.constant 0 : index
    %c4_150 = arith.constant 4 : index
    %c3_151 = arith.constant 3 : index
    %c0_152 = arith.constant 0 : index
    %506 = vector.load %arg4[%c0_149, %c4_150, %c3_151, %c0_152] : memref<1x6x4x128xf32, #tpu.memory_space<vmem>>, vector<1x1x1x128xf32>
    %507 = vector.shape_cast %506 : vector<1x1x1x128xf32> to vector<1x128xf32>
    %508 = vector.shape_cast %474 : vector<1x128xf32> to vector<1x1x1x128xf32>
    tpu.vector_store %arg4[%c0_149, %c4_150, %c3_151, %c0_152], %508 {strides = array<i32>} : memref<1x6x4x128xf32, #tpu.memory_space<vmem>>, vector<1x1x1x128xf32>,
    %c0_153 = arith.constant 0 : index
    %c4_154 = arith.constant 4 : index
    %c0_155 = arith.constant 0 : index
    %c0_156 = arith.constant 0 : index
    %509 = vector.load %arg5[%c0_153, %c4_154, %c0_155, %c0_156] : memref<1x6x3x128xf32, #tpu.memory_space<vmem>>, vector<1x1x3x128xf32>
    %510 = vector.shape_cast %509 : vector<1x1x3x128xf32> to vector<3x128xf32>
    %511 = vector.shape_cast %496 : vector<3x128xf32> to vector<1x1x3x128xf32>
    tpu.vector_store %arg5[%c0_153, %c4_154, %c0_155, %c0_156], %511 {strides = array<i32>} : memref<1x6x3x128xf32, #tpu.memory_space<vmem>>, vector<1x1x3x128xf32>,
    %512 = vector.extract_strided_slice %496 {offsets = [0, 0], sizes = [1, 128], strides = [1, 1]} : vector<3x128xf32> to vector<1x128xf32>
    %513 = vector.extract_strided_slice %41 {offsets = [0, 0], sizes = [1, 128], strides = [1, 1]} : vector<3x128xf32> to vector<1x128xf32>
    %514 = vector.extract_strided_slice %51 {offsets = [0, 0], sizes = [1, 128], strides = [1, 1]} : vector<3x128xf32> to vector<1x128xf32>
    %515 = vector.extract_strided_slice %61 {offsets = [0, 0], sizes = [1, 128], strides = [1, 1]} : vector<3x128xf32> to vector<1x128xf32>
    %516 = vector.extract_strided_slice %71 {offsets = [0, 0], sizes = [1, 128], strides = [1, 1]} : vector<3x128xf32> to vector<1x128xf32>
    %517 = vector.extract_strided_slice %496 {offsets = [1, 0], sizes = [1, 128], strides = [1, 1]} : vector<3x128xf32> to vector<1x128xf32>
    %518 = arith.cmpf ogt, %517, %512 : vector<1x128xf32>
    %519 = vector.extract_strided_slice %496 {offsets = [1, 0], sizes = [1, 128], strides = [1, 1]} : vector<3x128xf32> to vector<1x128xf32>
    %520 = arith.select %518, %519, %512 : vector<1x128xi1>, vector<1x128xf32>
    %521 = vector.extract_strided_slice %41 {offsets = [1, 0], sizes = [1, 128], strides = [1, 1]} : vector<3x128xf32> to vector<1x128xf32>
    %522 = arith.select %518, %521, %513 : vector<1x128xi1>, vector<1x128xf32>
    %523 = vector.extract_strided_slice %51 {offsets = [1, 0], sizes = [1, 128], strides = [1, 1]} : vector<3x128xf32> to vector<1x128xf32>
    %524 = arith.select %518, %523, %514 : vector<1x128xi1>, vector<1x128xf32>
    %525 = vector.extract_strided_slice %61 {offsets = [1, 0], sizes = [1, 128], strides = [1, 1]} : vector<3x128xf32> to vector<1x128xf32>
    %526 = arith.select %518, %525, %515 : vector<1x128xi1>, vector<1x128xf32>
    %527 = vector.extract_strided_slice %71 {offsets = [1, 0], sizes = [1, 128], strides = [1, 1]} : vector<3x128xf32> to vector<1x128xf32>
    %528 = arith.select %518, %527, %516 : vector<1x128xi1>, vector<1x128xf32>
    %529 = vector.extract_strided_slice %496 {offsets = [2, 0], sizes = [1, 128], strides = [1, 1]} : vector<3x128xf32> to vector<1x128xf32>
    %530 = arith.cmpf ogt, %529, %520 : vector<1x128xf32>
    %531 = vector.extract_strided_slice %41 {offsets = [2, 0], sizes = [1, 128], strides = [1, 1]} : vector<3x128xf32> to vector<1x128xf32>
    %532 = arith.select %530, %531, %522 : vector<1x128xi1>, vector<1x128xf32>
    %533 = vector.extract_strided_slice %51 {offsets = [2, 0], sizes = [1, 128], strides = [1, 1]} : vector<3x128xf32> to vector<1x128xf32>
    %534 = arith.select %530, %533, %524 : vector<1x128xi1>, vector<1x128xf32>
    %535 = vector.extract_strided_slice %61 {offsets = [2, 0], sizes = [1, 128], strides = [1, 1]} : vector<3x128xf32> to vector<1x128xf32>
    %536 = arith.select %530, %535, %526 : vector<1x128xi1>, vector<1x128xf32>
    %537 = vector.extract_strided_slice %71 {offsets = [2, 0], sizes = [1, 128], strides = [1, 1]} : vector<3x128xf32> to vector<1x128xf32>
    %538 = arith.select %530, %537, %528 : vector<1x128xi1>, vector<1x128xf32>
    %539 = arith.addf %532, %536 : vector<1x128xf32>
    %540 = arith.subf %539, %457 : vector<1x128xf32>
    %541 = arith.subf %540, %467 : vector<1x128xf32>
    %cst_157 = arith.constant 5.000000e-01 : f32
    %542 = vector.broadcast %cst_157 : f32 to vector<1x128xf32>
    %543 = arith.mulf %541, %542 : vector<1x128xf32>
    %544 = arith.addf %534, %538 : vector<1x128xf32>
    %545 = arith.subf %544, %460 : vector<1x128xf32>
    %546 = arith.subf %545, %474 : vector<1x128xf32>
    %cst_158 = arith.constant 5.000000e-01 : f32
    %547 = vector.broadcast %cst_158 : f32 to vector<1x128xf32>
    %548 = arith.mulf %546, %547 : vector<1x128xf32>
    %549 = arith.subf %536, %532 : vector<1x128xf32>
    %550 = arith.subf %467, %457 : vector<1x128xf32>
    %551 = arith.subf %549, %550 : vector<1x128xf32>
    %552 = arith.subf %538, %534 : vector<1x128xf32>
    %553 = arith.subf %474, %460 : vector<1x128xf32>
    %554 = arith.subf %552, %553 : vector<1x128xf32>
    %cst_159 = arith.constant 4.500000e-01 : f32
    %555 = vector.broadcast %cst_159 : f32 to vector<1x128xf32>
    %556 = arith.mulf %555, %543 : vector<1x128xf32>
    %557 = arith.addf %457, %556 : vector<1x128xf32>
    %cst_160 = arith.constant 4.500000e-01 : f32
    %558 = vector.broadcast %cst_160 : f32 to vector<1x128xf32>
    %559 = arith.mulf %558, %548 : vector<1x128xf32>
    %560 = arith.addf %460, %559 : vector<1x128xf32>
    %cst_161 = arith.constant 4.500000e-01 : f32
    %561 = vector.broadcast %cst_161 : f32 to vector<1x128xf32>
    %562 = arith.mulf %561, %543 : vector<1x128xf32>
    %563 = arith.addf %467, %562 : vector<1x128xf32>
    %564 = arith.subf %551, %543 : vector<1x128xf32>
    %cst_162 = arith.constant 4.000000e-01 : f32
    %565 = vector.broadcast %cst_162 : f32 to vector<1x128xf32>
    %566 = arith.mulf %565, %564 : vector<1x128xf32>
    %567 = arith.addf %563, %566 : vector<1x128xf32>
    %cst_163 = arith.constant 4.500000e-01 : f32
    %568 = vector.broadcast %cst_163 : f32 to vector<1x128xf32>
    %569 = arith.mulf %568, %548 : vector<1x128xf32>
    %570 = arith.addf %474, %569 : vector<1x128xf32>
    %571 = arith.subf %554, %548 : vector<1x128xf32>
    %cst_164 = arith.constant 4.000000e-01 : f32
    %572 = vector.broadcast %cst_164 : f32 to vector<1x128xf32>
    %573 = arith.mulf %572, %571 : vector<1x128xf32>
    %574 = arith.addf %570, %573 : vector<1x128xf32>
    %575 = arith.subf %567, %557 : vector<1x128xf32>
    %576 = arith.subf %574, %560 : vector<1x128xf32>
    %577 = arith.mulf %575, %576 : vector<1x128xf32>
    %578 = vector.broadcast %567 : vector<1x128xf32> to vector<3x128xf32>
    %579 = arith.minimumf %578, %61 : vector<3x128xf32>
    %580 = vector.broadcast %557 : vector<1x128xf32> to vector<3x128xf32>
    %581 = arith.maximumf %580, %41 : vector<3x128xf32>
    %582 = arith.subf %579, %581 : vector<3x128xf32>
    %cst_165 = arith.constant 0.000000e+00 : f32
    %583 = vector.broadcast %cst_165 : f32 to vector<3x128xf32>
    %584 = arith.maximumf %582, %583 : vector<3x128xf32>
    %585 = vector.broadcast %574 : vector<1x128xf32> to vector<3x128xf32>
    %586 = arith.minimumf %585, %71 : vector<3x128xf32>
    %587 = vector.broadcast %560 : vector<1x128xf32> to vector<3x128xf32>
    %588 = arith.maximumf %587, %51 : vector<3x128xf32>
    %589 = arith.subf %586, %588 : vector<3x128xf32>
    %cst_166 = arith.constant 0.000000e+00 : f32
    %590 = vector.broadcast %cst_166 : f32 to vector<3x128xf32>
    %591 = arith.maximumf %589, %590 : vector<3x128xf32>
    %592 = arith.mulf %584, %591 : vector<3x128xf32>
    %593 = vector.broadcast %577 : vector<1x128xf32> to vector<3x128xf32>
    %594 = arith.addf %593, %74 : vector<3x128xf32>
    %595 = arith.subf %594, %592 : vector<3x128xf32>
    %596 = arith.divf %592, %595 : vector<3x128xf32>
    %c0_167 = arith.constant 0 : index
    %c5_168 = arith.constant 5 : index
    %c0_169 = arith.constant 0 : index
    %c0_170 = arith.constant 0 : index
    %597 = vector.load %arg4[%c0_167, %c5_168, %c0_169, %c0_170] : memref<1x6x4x128xf32, #tpu.memory_space<vmem>>, vector<1x1x1x128xf32>
    %598 = vector.shape_cast %597 : vector<1x1x1x128xf32> to vector<1x128xf32>
    %599 = vector.shape_cast %557 : vector<1x128xf32> to vector<1x1x1x128xf32>
    tpu.vector_store %arg4[%c0_167, %c5_168, %c0_169, %c0_170], %599 {strides = array<i32>} : memref<1x6x4x128xf32, #tpu.memory_space<vmem>>, vector<1x1x1x128xf32>,
    %c0_171 = arith.constant 0 : index
    %c5_172 = arith.constant 5 : index
    %c1_173 = arith.constant 1 : index
    %c0_174 = arith.constant 0 : index
    %600 = vector.load %arg4[%c0_171, %c5_172, %c1_173, %c0_174] : memref<1x6x4x128xf32, #tpu.memory_space<vmem>>, vector<1x1x1x128xf32>
    %601 = vector.shape_cast %600 : vector<1x1x1x128xf32> to vector<1x128xf32>
    %602 = vector.shape_cast %560 : vector<1x128xf32> to vector<1x1x1x128xf32>
    tpu.vector_store %arg4[%c0_171, %c5_172, %c1_173, %c0_174], %602 {strides = array<i32>} : memref<1x6x4x128xf32, #tpu.memory_space<vmem>>, vector<1x1x1x128xf32>,
    %c0_175 = arith.constant 0 : index
    %c5_176 = arith.constant 5 : index
    %c2_177 = arith.constant 2 : index
    %c0_178 = arith.constant 0 : index
    %603 = vector.load %arg4[%c0_175, %c5_176, %c2_177, %c0_178] : memref<1x6x4x128xf32, #tpu.memory_space<vmem>>, vector<1x1x1x128xf32>
    %604 = vector.shape_cast %603 : vector<1x1x1x128xf32> to vector<1x128xf32>
    %605 = vector.shape_cast %567 : vector<1x128xf32> to vector<1x1x1x128xf32>
    tpu.vector_store %arg4[%c0_175, %c5_176, %c2_177, %c0_178], %605 {strides = array<i32>} : memref<1x6x4x128xf32, #tpu.memory_space<vmem>>, vector<1x1x1x128xf32>,
    %c0_179 = arith.constant 0 : index
    %c5_180 = arith.constant 5 : index
    %c3_181 = arith.constant 3 : index
    %c0_182 = arith.constant 0 : index
    %606 = vector.load %arg4[%c0_179, %c5_180, %c3_181, %c0_182] : memref<1x6x4x128xf32, #tpu.memory_space<vmem>>, vector<1x1x1x128xf32>
    %607 = vector.shape_cast %606 : vector<1x1x1x128xf32> to vector<1x128xf32>
    %608 = vector.shape_cast %574 : vector<1x128xf32> to vector<1x1x1x128xf32>
    tpu.vector_store %arg4[%c0_179, %c5_180, %c3_181, %c0_182], %608 {strides = array<i32>} : memref<1x6x4x128xf32, #tpu.memory_space<vmem>>, vector<1x1x1x128xf32>,
    %c0_183 = arith.constant 0 : index
    %c5_184 = arith.constant 5 : index
    %c0_185 = arith.constant 0 : index
    %c0_186 = arith.constant 0 : index
    %609 = vector.load %arg5[%c0_183, %c5_184, %c0_185, %c0_186] : memref<1x6x3x128xf32, #tpu.memory_space<vmem>>, vector<1x1x3x128xf32>
    %610 = vector.shape_cast %609 : vector<1x1x3x128xf32> to vector<3x128xf32>
    %611 = vector.shape_cast %596 : vector<3x128xf32> to vector<1x1x3x128xf32>
    tpu.vector_store %arg5[%c0_183, %c5_184, %c0_185, %c0_186], %611 {strides = array<i32>} : memref<1x6x3x128xf32, #tpu.memory_space<vmem>>, vector<1x1x3x128xf32>,
    return
  }
  func.func @transform_0(%arg0: i32, %arg1: i32) -> (i32, i32) {
    %c0_i32 = arith.constant 0 : i32
    %c0_i32_0 = arith.constant 0 : i32
    %c0_i32_1 = arith.constant 0 : i32
    return %c0_i32, %c0_i32_0 : i32, i32
  }
  func.func @transform_1(%arg0: i32, %arg1: i32) -> (i32, i32, i32) {
    %c0_i32 = arith.constant 0 : i32
    %c0_i32_0 = arith.constant 0 : i32
    return %arg0, %c0_i32, %arg1 : i32, i32, i32
  }
  func.func @transform_2(%arg0: i32, %arg1: i32) -> (i32, i32, i32, i32) {
    %c0_i32 = arith.constant 0 : i32
    %c0_i32_0 = arith.constant 0 : i32
    %c0_i32_1 = arith.constant 0 : i32
    return %arg0, %c0_i32, %c0_i32_0, %arg1 : i32, i32, i32, i32
  }
  func.func @transform_3(%arg0: i32, %arg1: i32) -> (i32, i32, i32, i32) {
    %c0_i32 = arith.constant 0 : i32
    %c0_i32_0 = arith.constant 0 : i32
    %c0_i32_1 = arith.constant 0 : i32
    return %arg0, %c0_i32, %c0_i32_0, %arg1 : i32, i32, i32, i32
  }
}

</mosaic_0001>

<llo_original>
// kernel: direct_vg_forward.1
$region0: #{direct_vg_forward.1}
  #allocation0 [shape = 'u32[]', space=smem, size = 0x4, offset = 0x4, fixed_abs, tag = 'smem constant byte address 0x4 - core index']
  #allocation1 [shape = 'u32[144,128]{1,0:T(1,128)}', space=vmem, size = 0x12000, scoped, tag = 'internal scratch']
  %s0 = inlined_call_operand.vmem [shape: f32[2,14], index: 0, kind: input, shape index: {}]
  %s1 = inlined_call_operand.vmem [shape: f32[2,4,128], index: 1, kind: input, shape index: {}]
  %s2 = inlined_call_operand.vmem [shape: f32[2,6,4,128], index: 2, kind: output, shape index: {0}]
  %s3 = inlined_call_operand.vmem [shape: f32[2,6,3,128], index: 3, kind: output, shape index: {1}]
  %4 = xla_tuple %s2, %s3
  %s5 = sld [smem:[#allocation0]]
  $region53: #{direct_vg_forward.1} parent=0
    _
  %s7 = ssub.s32 1, %s5
  %s8 = scalar_select 0, %s7, %s5
  $region1: #{direct_vg_forward.1} parent=0
    #allocation2 [shape = 'u8[1024]{0}', space=smem, size = 0x400, scoped, tag = 'input window, operand 0, single buffered']
    #allocation3 [shape = 's32[2]{0}', space=sflag, size = 0x8, scoped, tag = 'scoped memory for direct_vg_forward.1']
    %9 = vsyncpa [#allocation3], 0
    loop: start=0, step=1, limit=4
    $region2: #{direct_vg_forward.1} parent=1 // loop_pre_header
      _
    $region3: #{direct_vg_forward.1} parent=1 // loop_header
      %s11 = sphi 0, %s15
      %p12 = scmp.ge.s32.totalorder %s11, 4
      %s18 = sphi 0, %s30
      %s19 = sphi 0, %s26
      %s20 = sphi 0, %s18
      %s21 = sphi 0, %s19
      %s22 = sphi 0, %s20
      %s23 = sphi 0, %s21
      %s31 = sphi 0, %s31
      %s33 = sphi 0, %s31
      %s34 = sphi 0, %s33
      %s48 = sphi 0, %s34
      %s56 = sphi 0, %s58
      %s59 = sphi 0, %s56
      %s60 = sphi 0, %s59
      %s76 = sphi 0, %s60
      %s84 = sphi 0, %s86
      %s87 = sphi 0, %s84
      %s88 = sphi 0, %s87
      %s104 = sphi 0, %s88
      %s112 = sphi 0, %s114
      %s115 = sphi 0, %s112
      %s116 = sphi 0, %s115
      %s132 = sphi 0, %s116
    $region4: #{direct_vg_forward.1} parent=1 // loop_header_branch
      %14 = sbr.rel (%p12) target = $region8
    $region5: #{direct_vg_forward.1} parent=1 // loop_body
      %s16 = ssub.s32 %s11, 1
      %s17 = ssub.s32 %s11, 2
      %s24 = sadd.s32 1, %s19
      %p25 = scmp.ge.s32.totalorder %s24, 1
      %s26 = scalar_select %p25, 0, %s24
      %s27 = sadd.s32 1, %s18
      %s28 = scalar_select %p25, %s27, %s18
      %p29 = scmp.ge.s32.totalorder %s28, 2
      %s30 = scalar_select %p29, 0, %s28
      %s32 = sadd.s32 %s31, 1
      %p35 = scmp.eq.s32.totalorder %s11, 1
      %p36 = scmp.ne.s32.totalorder %s31, %s33
      %p37 = scmp.eq.s32.totalorder %s11, 0
      %p38 = por %p36, %p37
      %p39 = scmp.ne.s32.totalorder %s31, %s33
      %p40 = scmp.eq.s32.totalorder %s16, 1
      %p41 = por %p39, %p40
      %p42 = scmp.ne.s32.totalorder %s33, %s34
      %p43 = scmp.eq.s32.totalorder %s16, 0
      %p44 = por %p42, %p43
      %p45 = scmp.ne.s32.totalorder %s33, %s34
      %p46 = scmp.eq.s32.totalorder %s17, 1
      %p47 = por %p45, %p46
      %p49 = scmp.ne.s32.totalorder %s34, %s48
      %p50 = scmp.eq.s32.totalorder %s17, 0
      %p51 = por %p49, %p50
      %s52 = ssub.s32 %s18, %s30
      %s53 = ssub.s32 %s19, %s26
      %s54 = sor.u32 %s52, %s53
      %p55 = scmp.eq.s32.totalorder %s54, 0
      %s57 = sadd.s32 %s56, 1
      %s58 = scalar_select %p55, %s56, %s57
      %p61 = pneg %p55
      %p62 = scmp.eq.s32.totalorder %s11, 1
      %p63 = por %p61, %p62
      %p64 = scmp.ne.s32.totalorder %s56, %s59
      %p65 = scmp.eq.s32.totalorder %s11, 0
      %p66 = por %p64, %p65
      %p67 = scmp.ne.s32.totalorder %s56, %s59
      %p68 = scmp.eq.s32.totalorder %s16, 1
      %p69 = por %p67, %p68
      %p70 = scmp.ne.s32.totalorder %s59, %s60
      %p71 = scmp.eq.s32.totalorder %s16, 0
      %p72 = por %p70, %p71
      %p73 = scmp.ne.s32.totalorder %s59, %s60
      %p74 = scmp.eq.s32.totalorder %s17, 1
      %p75 = por %p73, %p74
      %p77 = scmp.ne.s32.totalorder %s60, %s76
      %p78 = scmp.eq.s32.totalorder %s17, 0
      %p79 = por %p77, %p78
      %s80 = ssub.s32 %s18, %s30
      %s81 = ssub.s32 %s19, %s26
      %s82 = sor.u32 %s80, %s81
      %p83 = scmp.eq.s32.totalorder %s82, 0
      %s85 = sadd.s32 %s84, 1
      %s86 = scalar_select %p83, %s84, %s85
      %p89 = pneg %p83
      %p90 = scmp.eq.s32.totalorder %s11, 1
      %p91 = por %p89, %p90
      %p92 = scmp.ne.s32.totalorder %s84, %s87
      %p93 = scmp.eq.s32.totalorder %s11, 0
      %p94 = por %p92, %p93
      %p95 = scmp.ne.s32.totalorder %s84, %s87
      %p96 = scmp.eq.s32.totalorder %s16, 1
      %p97 = por %p95, %p96
      %p98 = scmp.ne.s32.totalorder %s87, %s88
      %p99 = scmp.eq.s32.totalorder %s16, 0
      %p100 = por %p98, %p99
      %p101 = scmp.ne.s32.totalorder %s87, %s88
      %p102 = scmp.eq.s32.totalorder %s17, 1
      %p103 = por %p101, %p102
      %p105 = scmp.ne.s32.totalorder %s88, %s104
      %p106 = scmp.eq.s32.totalorder %s17, 0
      %p107 = por %p105, %p106
      %s108 = ssub.s32 %s18, %s30
      %s109 = ssub.s32 %s19, %s26
      %s110 = sor.u32 %s108, %s109
      %p111 = scmp.eq.s32.totalorder %s110, 0
      %s113 = sadd.s32 %s112, 1
      %s114 = scalar_select %p111, %s112, %s113
      %p117 = pneg %p111
      %p118 = scmp.eq.s32.totalorder %s11, 1
      %p119 = por %p117, %p118
      %p120 = scmp.ne.s32.totalorder %s112, %s115
      %p121 = scmp.eq.s32.totalorder %s11, 0
      %p122 = por %p120, %p121
      %p123 = scmp.ne.s32.totalorder %s112, %s115
      %p124 = scmp.eq.s32.totalorder %s16, 1
      %p125 = por %p123, %p124
      %p126 = scmp.ne.s32.totalorder %s115, %s116
      %p127 = scmp.eq.s32.totalorder %s16, 0
      %p128 = por %p126, %p127
      %p129 = scmp.ne.s32.totalorder %s115, %s116
      %p130 = scmp.eq.s32.totalorder %s17, 1
      %p131 = por %p129, %p130
      %p133 = scmp.ne.s32.totalorder %s116, %s132
      %p134 = scmp.eq.s32.totalorder %s17, 0
      %p135 = por %p133, %p134
      %p136 = scmp.le.s32.totalorder 1, %s11
      %p137 = scmp.lt.s32.totalorder %s11, 3
      %p138 = pnand %p136, %p137
      %p139 = pneg %p138
      // Predicated region
      $region9: #{direct_vg_forward.1} parent=5 // pred_check
        _
      $region10: #{direct_vg_forward.1} parent=5 // pred_check_branch
        %141 = sbr.rel (%p138) target = $region12
      $region11: #{direct_vg_forward.1} parent=5 // pred_region
        %s142 = ssub.s32 %s11, 1
        // Predicated region
        $region13: #{direct_vg_forward.1} parent=11 // pred_check
          %p143 = pneg %p44
        $region14: #{direct_vg_forward.1} parent=11 // pred_check_branch
          %145 = sbr.rel (%p143) target = $region16
        $region15: #{direct_vg_forward.1} parent=11 // pred_region
          %s147 = ssub.s32 32, 32
          %148 = vsyncadd [#allocation3], %s147
          %s150 = sshll.u32 %s0, 4
          %s151 = int_to_ptr.vmem [resolvable:$true] %s150
          %153 = dma.vmem_to_smem %s151, 32, [#allocation2], [#allocation3]
        $region16: #{direct_vg_forward.1} parent=11 // pred_fallthru
          _
      $region12: #{direct_vg_forward.1} parent=5 // pred_fallthru
        _
      %p154 = scmp.lt.s32.totalorder %s11, 2
      // Predicated region
      $region17: #{direct_vg_forward.1} parent=5 // pred_check
        %p155 = pneg %p154
      $region18: #{direct_vg_forward.1} parent=5 // pred_check_branch
        %157 = sbr.rel (%p155) target = $region20
      $region19: #{direct_vg_forward.1} parent=5 // pred_region
        // Predicated region
        $region21: #{direct_vg_forward.1} parent=19 // pred_check
          %p158 = pneg %p66
        $region22: #{direct_vg_forward.1} parent=19 // pred_check_branch
          %160 = sbr.rel (%p158) target = $region24
        $region23: #{direct_vg_forward.1} parent=19 // pred_region
          %p161 = scmp.lt.s32.totalorder %s18, 1
          %s162 = scalar_select %p161, %s18, 1
          %p163 = scmp.lt.s32.totalorder %s19, 0
          %s164 = scalar_select %p163, %s19, 0
          %s165 = sadd.s32 %s164, %s162
          %s166 = smul.addr %s165, 4
          %s167 = scalar_lea.vmem %s1, %s166
        $region24: #{direct_vg_forward.1} parent=19 // pred_fallthru
          _
      $region20: #{direct_vg_forward.1} parent=5 // pred_fallthru
        _
      %p168 = scmp.le.s32.totalorder 1, %s11
      %p169 = scmp.lt.s32.totalorder %s11, 3
      %p170 = pnand %p168, %p169
      %p171 = pneg %p170
      // Predicated region
      $region25: #{direct_vg_forward.1} parent=5 // pred_check
        _
      $region26: #{direct_vg_forward.1} parent=5 // pred_check_branch
        %173 = sbr.rel (%p170) target = $region28
      $region27: #{direct_vg_forward.1} parent=5 // pred_region
        %s174 = ssub.s32 %s11, 1
        // Predicated region
        $region29: #{direct_vg_forward.1} parent=27 // pred_check
          %p175 = pneg %p44
        $region30: #{direct_vg_forward.1} parent=27 // pred_check_branch
          %177 = sbr.rel (%p175) target = $region32
        $region31: #{direct_vg_forward.1} parent=27 // pred_region
          %178 = dma.done [#allocation3], 32
        $region32: #{direct_vg_forward.1} parent=27 // pred_fallthru
          _
        %179 = sfence
        %p180 = pneg %p44
        %p181 = pneg %p41
        %p182 = scmp.lt.s32.totalorder %s20, 1
        %s183 = scalar_select %p182, %s20, 1
        %p184 = scmp.lt.s32.totalorder %s21, 0
        %s185 = scalar_select %p184, %s21, 0
        %s186 = sadd.s32 %s185, %s183
        %s187 = smul.addr %s186, 4
        %s188 = scalar_lea.vmem %s1, %s187
        %p189 = pneg %p72
        %p190 = pneg %p69
        %p191 = pneg %p100
        %p192 = pneg %p97
        %p193 = scmp.lt.s32.totalorder %s20, 1
        %s194 = scalar_select %p193, %s20, 1
        %p195 = scmp.lt.s32.totalorder %s21, 0
        %s196 = scalar_select %p195, %s21, 0
        %s197 = smul.addr %s194, 6
        %s198 = sadd.s32 %s196, %s197
        %s199 = smul.addr %s198, 4
        %s200 = scalar_lea.vmem %s2, %s199
        %p201 = pneg %p128
        %p202 = pneg %p125
        %p203 = scmp.lt.s32.totalorder %s20, 1
        %s204 = scalar_select %p203, %s20, 1
        %p205 = scmp.lt.s32.totalorder %s21, 0
        %s206 = scalar_select %p205, %s21, 0
        %s207 = smul.addr %s204, 6
        %s208 = sadd.s32 %s206, %s207
        %s209 = smul.addr %s208, 4
        %s210 = scalar_lea.vmem %s3, %s209
        %p211 = scmp.lt.s32.totalorder %s20, 1
        %s212 = scalar_select %p211, %s20, 1
        %p213 = scmp.lt.s32.totalorder %s21, 0
        %s214 = scalar_select %p213, %s21, 0
        %s215 = sadd.s32 %s214, %s212
        %s216 = smul.addr %s215, 4
        %s217 = scalar_lea.vmem %s1, %s216
        %p218 = scmp.lt.s32.totalorder %s20, 1
        %s219 = scalar_select %p218, %s20, 1
        %p220 = scmp.lt.s32.totalorder %s21, 0
        %s221 = scalar_select %p220, %s21, 0
        %s222 = smul.addr %s219, 6
        %s223 = sadd.s32 %s221, %s222
        %s224 = smul.addr %s223, 4
        %s225 = scalar_lea.vmem %s2, %s224
        %p226 = scmp.lt.s32.totalorder %s20, 1
        %s227 = scalar_select %p226, %s20, 1
        %p228 = scmp.lt.s32.totalorder %s21, 0
        %s229 = scalar_select %p228, %s21, 0
        %s230 = smul.addr %s227, 6
        %s231 = sadd.s32 %s229, %s230
        %s232 = smul.addr %s231, 4
        %s233 = scalar_lea.vmem %s3, %s232
        %s234 = smul.u32 %s20, 128
        %s235 = sld [smem:[#allocation2 + %s234]]
        %s236 = sadd.s32 %s234, 1
        %s237 = sld [smem:[#allocation2 + %s236]]
        %v238 = vld [vmem:[%s217] sm:$0x1]
        %v239 = vld [vmem:[%s217 + $0x1] sm:$0x1]
        %v240 = vld [vmem:[%s217 + $0x2] sm:$0x1]
        %v241 = vld [vmem:[%s217 + $0x3] sm:$0x1]
        %v242 = vmul.f32 %v240, 0.5
        %v243 = vsub.f32 %v238, %v242
        %v244 = vstv %s235
        %v245 = vmul.f32 %v243, %v244
        %v246 = vmul.f32 %v241, 0.5
        %v247 = vsub.f32 %v239, %v246
        %v248 = vstv %s237
        %v249 = vmul.f32 %v247, %v248
        %v250 = vadd.f32 %v238, %v242
        %v251 = vmul.f32 %v250, %v244
        %v252 = vadd.f32 %v239, %v246
        %v253 = vmul.f32 %v252, %v248
        %s254 = sadd.s32 %s234, 2
        %s255 = sld [smem:[#allocation2 + %s254]]
        %v256 = vstv %s255
        %s257 = sadd.s32 %s234, 6
        %s258 = sld [smem:[#allocation2 + %s257]]
        %v259 = vstv %s258
        %s260 = sadd.s32 %s234, 10
        %s261 = sld [smem:[#allocation2 + %s260]]
        %v262 = vstv %s261
        %vm263 = vcmask 1040384
        %v264 = vsel %vm263, %v256, %v259
        %vm265 = vcmask 1041408
        %v266 = vsel %vm265, %v264, %v262
        %s267 = sadd.s32 %s234, 3
        %s268 = sld [smem:[#allocation2 + %s267]]
        %v269 = vstv %s268
        %s270 = sadd.s32 %s234, 7
        %s271 = sld [smem:[#allocation2 + %s270]]
        %v272 = vstv %s271
        %s273 = sadd.s32 %s234, 11
        %s274 = sld [smem:[#allocation2 + %s273]]
        %v275 = vstv %s274
        %v276 = vsel %vm263, %v269, %v272
        %v277 = vsel %vm265, %v276, %v275
        %s278 = sadd.s32 %s234, 4
        %s279 = sld [smem:[#allocation2 + %s278]]
        %v280 = vstv %s279
        %s281 = sadd.s32 %s234, 8
        %s282 = sld [smem:[#allocation2 + %s281]]
        %v283 = vstv %s282
        %s284 = sadd.s32 %s234, 12
        %s285 = sld [smem:[#allocation2 + %s284]]
        %v286 = vstv %s285
        %v287 = vsel %vm263, %v280, %v283
        %v288 = vsel %vm265, %v287, %v286
        %s289 = sadd.s32 %s234, 5
        %s290 = sld [smem:[#allocation2 + %s289]]
        %v291 = vstv %s290
        %s292 = sadd.s32 %s234, 9
        %s293 = sld [smem:[#allocation2 + %s292]]
        %v294 = vstv %s293
        %s295 = sadd.s32 %s234, 13
        %s296 = sld [smem:[#allocation2 + %s295]]
        %v297 = vstv %s296
        %v298 = vsel %vm263, %v291, %v294
        %v299 = vsel %vm265, %v298, %v297
        %v300 = vsub.f32 %v288, %v266
        %v301 = vsub.f32 %v299, %v277
        %v302 = vmul.f32 %v300, %v301
        %v303 = vsub.f32 %v251, %v245
        %v304 = vsub.f32 %v253, %v249
        %v305 = vmul.f32 %v303, %v304
        %v306 = vlaneseq
        %v307 = vshrl.u32 %v306, 7
        %v308 = vsub.s32 0, %v307
        %v309 = vrot.slane %v251, %v308
        %v310 = vmin.f32 %v309, %v288
        %v311 = vlaneseq
        %v312 = vshrl.u32 %v311, 7
        %v313 = vsub.s32 0, %v312
        %v314 = vrot.slane %v245, %v313
        %v315 = vmax.f32 %v314, %v266
        %v316 = vsub.f32 %v310, %v315
        %v317 = vmax.f32 %v316, 0.0
        %v318 = vlaneseq
        %v319 = vshrl.u32 %v318, 7
        %v320 = vsub.s32 0, %v319
        %v321 = vrot.slane %v253, %v320
        %v322 = vmin.f32 %v321, %v299
        %v323 = vlaneseq
        %v324 = vshrl.u32 %v323, 7
        %v325 = vsub.s32 0, %v324
        %v326 = vrot.slane %v249, %v325
        %v327 = vmax.f32 %v326, %v277
        %v328 = vsub.f32 %v322, %v327
        %v329 = vmax.f32 %v328, 0.0
        %v330 = vmul.f32 %v317, %v329
        %v331 = vlaneseq
        %v332 = vshrl.u32 %v331, 7
        %v333 = vsub.s32 0, %v332
        %v334 = vrot.slane %v305, %v333
        %v335 = vadd.f32 %v334, %v302
        %v336 = vsub.f32 %v335, %v330
        %v337 = vrcp.pop %v336
        %v338 = vmul.f32 %v330, %v337
        %339 = vst [vmem:[%s225] sm:$0x1] %v245
        %340 = vst [vmem:[%s225 + $0x1] sm:$0x1] %v249
        %341 = vst [vmem:[%s225 + $0x2] sm:$0x1] %v251
        %342 = vst [vmem:[%s225 + $0x3] sm:$0x1] %v253
        %343 = vst [vmem:[%s233] sm:$0x7] %v338
        %v345 = vrot.slane %v338, 7
        %vm347 = vcmp.gt.f32.partialorder %v338, %v345
        %v348 = vsel %vm347, %v338, %v345
        %v350 = vrot.slane %v266, 7
        %v352 = vsel %vm347, %v266, %v350
        %v354 = vrot.slane %v277, 7
        %v356 = vsel %vm347, %v277, %v354
        %v358 = vrot.slane %v288, 7
        %v360 = vsel %vm347, %v288, %v358
        %v362 = vrot.slane %v299, 7
        %v364 = vsel %vm347, %v299, %v362
        %v366 = vrot.slane %v348, 7
        %vm368 = vcmp.gt.f32.partialorder %v338, %v366
        %v370 = vrot.slane %v352, 7
        %v372 = vsel %vm368, %v266, %v370
        %v374 = vrot.slane %v356, 7
        %v376 = vsel %vm368, %v277, %v374
        %v378 = vrot.slane %v360, 7
        %v380 = vsel %vm368, %v288, %v378
        %v382 = vrot.slane %v364, 7
        %v384 = vsel %vm368, %v299, %v382
        %v385 = vadd.f32 %v372, %v380
        %v387 = vrot.slane %v245, 6
        %v389 = vsub.f32 %v385, %v387
        %v391 = vrot.slane %v251, 6
        %v393 = vsub.f32 %v389, %v391
        %v394 = vmul.f32 %v393, 0.5
        %v395 = vadd.f32 %v376, %v384
        %v397 = vrot.slane %v249, 6
        %v399 = vsub.f32 %v395, %v397
        %v401 = vrot.slane %v253, 6
        %v403 = vsub.f32 %v399, %v401
        %v404 = vmul.f32 %v403, 0.5
        %v405 = vsub.f32 %v380, %v372
        %v407 = vrot.slane %v303, 6
        %v409 = vsub.f32 %v405, %v407
        %v410 = vsub.f32 %v384, %v376
        %v412 = vrot.slane %v304, 6
        %v414 = vsub.f32 %v410, %v412
        %v415 = vmul.f32 %v394, 0.45
        %v417 = vrot.slane %v415, 2
        %v419 = vadd.f32 %v245, %v417
        %v420 = vmul.f32 %v404, 0.45
        %v422 = vrot.slane %v420, 2
        %v424 = vadd.f32 %v249, %v422
        %v425 = vadd.f32 %v251, %v417
        %v426 = vsub.f32 %v409, %v394
        %v427 = vmul.f32 %v426, 0.4
        %v429 = vrot.slane %v427, 2
        %v431 = vadd.f32 %v425, %v429
        %v432 = vadd.f32 %v253, %v422
        %v433 = vsub.f32 %v414, %v404
        %v434 = vmul.f32 %v433, 0.4
        %v436 = vrot.slane %v434, 2
        %v438 = vadd.f32 %v432, %v436
        %v439 = vsub.f32 %v431, %v419
        %v440 = vsub.f32 %v438, %v424
        %v441 = vmul.f32 %v439, %v440
        %v442 = vlaneseq
        %v443 = vshrl.u32 %v442, 7
        %v444 = vsub.s32 0, %v443
        %v445 = vrot.slane %v431, %v444
        %v446 = vmin.f32 %v445, %v288
        %v447 = vlaneseq
        %v448 = vshrl.u32 %v447, 7
        %v449 = vsub.s32 0, %v448
        %v450 = vrot.slane %v419, %v449
        %v451 = vmax.f32 %v450, %v266
        %v452 = vsub.f32 %v446, %v451
        %v453 = vmax.f32 %v452, 0.0
        %v454 = vlaneseq
        %v455 = vshrl.u32 %v454, 7
        %v456 = vsub.s32 0, %v455
        %v457 = vrot.slane %v438, %v456
        %v458 = vmin.f32 %v457, %v299
        %v459 = vlaneseq
        %v460 = vshrl.u32 %v459, 7
        %v461 = vsub.s32 0, %v460
        %v462 = vrot.slane %v424, %v461
        %v463 = vmax.f32 %v462, %v277
        %v464 = vsub.f32 %v458, %v463
        %v465 = vmax.f32 %v464, 0.0
        %v466 = vmul.f32 %v453, %v465
        %v467 = vlaneseq
        %v468 = vshrl.u32 %v467, 7
        %v469 = vsub.s32 0, %v468
        %v470 = vrot.slane %v441, %v469
        %v471 = vadd.f32 %v470, %v302
        %v472 = vsub.f32 %v471, %v466
        %v473 = vrcp.pop %v472
        %v474 = vmul.f32 %v466, %v473
        %s475 = scalar_lea.vmem %s225, 4
        %476 = vst [vmem:[%s475] sm:$0x1] %v419
        %477 = vst [vmem:[%s475 + $0x1] sm:$0x1] %v424
        %478 = vst [vmem:[%s475 + $0x2] sm:$0x1] %v431
        %479 = vst [vmem:[%s475 + $0x3] sm:$0x1] %v438
        %s480 = scalar_lea.vmem %s233, 4
        %481 = vst [vmem:[%s480] sm:$0x7] %v474
        %v483 = vrot.slane %v474, 7
        %vm485 = vcmp.gt.f32.partialorder %v474, %v483
        %v486 = vsel %vm485, %v474, %v483
        %v487 = vsel %vm485, %v266, %v350
        %v488 = vsel %vm485, %v277, %v354
        %v489 = vsel %vm485, %v288, %v358
        %v490 = vsel %vm485, %v299, %v362
        %v492 = vrot.slane %v486, 7
        %vm494 = vcmp.gt.f32.partialorder %v474, %v492
        %v496 = vrot.slane %v487, 7
        %v498 = vsel %vm494, %v266, %v496
        %v500 = vrot.slane %v488, 7
        %v502 = vsel %vm494, %v277, %v500
        %v504 = vrot.slane %v489, 7
        %v506 = vsel %vm494, %v288, %v504
        %v508 = vrot.slane %v490, 7
        %v510 = vsel %vm494, %v299, %v508
        %v511 = vadd.f32 %v498, %v506
        %v513 = vrot.slane %v419, 6
        %v515 = vsub.f32 %v511, %v513
        %v517 = vrot.slane %v431, 6
        %v519 = vsub.f32 %v515, %v517
        %v520 = vmul.f32 %v519, 0.5
        %v521 = vadd.f32 %v502, %v510
        %v523 = vrot.slane %v424, 6
        %v525 = vsub.f32 %v521, %v523
        %v527 = vrot.slane %v438, 6
        %v529 = vsub.f32 %v525, %v527
        %v530 = vmul.f32 %v529, 0.5
        %v531 = vsub.f32 %v506, %v498
        %v533 = vrot.slane %v439, 6
        %v535 = vsub.f32 %v531, %v533
        %v536 = vsub.f32 %v510, %v502
        %v538 = vrot.slane %v440, 6
        %v540 = vsub.f32 %v536, %v538
        %v541 = vmul.f32 %v520, 0.45
        %v543 = vrot.slane %v541, 2
        %v545 = vadd.f32 %v419, %v543
        %v546 = vmul.f32 %v530, 0.45
        %v548 = vrot.slane %v546, 2
        %v550 = vadd.f32 %v424, %v548
        %v551 = vadd.f32 %v431, %v543
        %v552 = vsub.f32 %v535, %v520
        %v553 = vmul.f32 %v552, 0.4
        %v555 = vrot.slane %v553, 2
        %v557 = vadd.f32 %v551, %v555
        %v558 = vadd.f32 %v438, %v548
        %v559 = vsub.f32 %v540, %v530
        %v560 = vmul.f32 %v559, 0.4
        %v562 = vrot.slane %v560, 2
        %v564 = vadd.f32 %v558, %v562
        %v565 = vsub.f32 %v557, %v545
        %v566 = vsub.f32 %v564, %v550
        %v567 = vmul.f32 %v565, %v566
        %v568 = vlaneseq
        %v569 = vshrl.u32 %v568, 7
        %v570 = vsub.s32 0, %v569
        %v571 = vrot.slane %v557, %v570
        %v572 = vmin.f32 %v571, %v288
        %v573 = vlaneseq
        %v574 = vshrl.u32 %v573, 7
        %v575 = vsub.s32 0, %v574
        %v576 = vrot.slane %v545, %v575
        %v577 = vmax.f32 %v576, %v266
        %v578 = vsub.f32 %v572, %v577
        %v579 = vmax.f32 %v578, 0.0
        %v580 = vlaneseq
        %v581 = vshrl.u32 %v580, 7
        %v582 = vsub.s32 0, %v581
        %v583 = vrot.slane %v564, %v582
        %v584 = vmin.f32 %v583, %v299
        %v585 = vlaneseq
        %v586 = vshrl.u32 %v585, 7
        %v587 = vsub.s32 0, %v586
        %v588 = vrot.slane %v550, %v587
        %v589 = vmax.f32 %v588, %v277
        %v590 = vsub.f32 %v584, %v589
        %v591 = vmax.f32 %v590, 0.0
        %v592 = vmul.f32 %v579, %v591
        %v593 = vlaneseq
        %v594 = vshrl.u32 %v593, 7
        %v595 = vsub.s32 0, %v594
        %v596 = vrot.slane %v567, %v595
        %v597 = vadd.f32 %v596, %v302
        %v598 = vsub.f32 %v597, %v592
        %v599 = vrcp.pop %v598
        %v600 = vmul.f32 %v592, %v599
        %s601 = scalar_lea.vmem %s225, 8
        %602 = vst [vmem:[%s601] sm:$0x1] %v545
        %603 = vst [vmem:[%s601 + $0x1] sm:$0x1] %v550
        %604 = vst [vmem:[%s601 + $0x2] sm:$0x1] %v557
        %605 = vst [vmem:[%s601 + $0x3] sm:$0x1] %v564
        %s606 = scalar_lea.vmem %s233, 8
        %607 = vst [vmem:[%s606] sm:$0x7] %v600
        %v609 = vrot.slane %v600, 7
        %vm611 = vcmp.gt.f32.partialorder %v600, %v609
        %v612 = vsel %vm611, %v600, %v609
        %v613 = vsel %vm611, %v266, %v350
        %v614 = vsel %vm611, %v277, %v354
        %v615 = vsel %vm611, %v288, %v358
        %v616 = vsel %vm611, %v299, %v362
        %v618 = vrot.slane %v612, 7
        %vm620 = vcmp.gt.f32.partialorder %v600, %v618
        %v622 = vrot.slane %v613, 7
        %v624 = vsel %vm620, %v266, %v622
        %v626 = vrot.slane %v614, 7
        %v628 = vsel %vm620, %v277, %v626
        %v630 = vrot.slane %v615, 7
        %v632 = vsel %vm620, %v288, %v630
        %v634 = vrot.slane %v616, 7
        %v636 = vsel %vm620, %v299, %v634
        %v637 = vadd.f32 %v624, %v632
        %v639 = vrot.slane %v545, 6
        %v641 = vsub.f32 %v637, %v639
        %v643 = vrot.slane %v557, 6
        %v645 = vsub.f32 %v641, %v643
        %v646 = vmul.f32 %v645, 0.5
        %v647 = vadd.f32 %v628, %v636
        %v649 = vrot.slane %v550, 6
        %v651 = vsub.f32 %v647, %v649
        %v653 = vrot.slane %v564, 6
        %v655 = vsub.f32 %v651, %v653
        %v656 = vmul.f32 %v655, 0.5
        %v657 = vsub.f32 %v632, %v624
        %v659 = vrot.slane %v565, 6
        %v661 = vsub.f32 %v657, %v659
        %v662 = vsub.f32 %v636, %v628
        %v664 = vrot.slane %v566, 6
        %v666 = vsub.f32 %v662, %v664
        %v667 = vmul.f32 %v646, 0.45
        %v669 = vrot.slane %v667, 2
        %v671 = vadd.f32 %v545, %v669
        %v672 = vmul.f32 %v656, 0.45
        %v674 = vrot.slane %v672, 2
        %v676 = vadd.f32 %v550, %v674
        %v677 = vadd.f32 %v557, %v669
        %v678 = vsub.f32 %v661, %v646
        %v679 = vmul.f32 %v678, 0.4
        %v681 = vrot.slane %v679, 2
        %v683 = vadd.f32 %v677, %v681
        %v684 = vadd.f32 %v564, %v674
        %v685 = vsub.f32 %v666, %v656
        %v686 = vmul.f32 %v685, 0.4
        %v688 = vrot.slane %v686, 2
        %v690 = vadd.f32 %v684, %v688
        %v691 = vsub.f32 %v683, %v671
        %v692 = vsub.f32 %v690, %v676
        %v693 = vmul.f32 %v691, %v692
        %v694 = vlaneseq
        %v695 = vshrl.u32 %v694, 7
        %v696 = vsub.s32 0, %v695
        %v697 = vrot.slane %v683, %v696
        %v698 = vmin.f32 %v697, %v288
        %v699 = vlaneseq
        %v700 = vshrl.u32 %v699, 7
        %v701 = vsub.s32 0, %v700
        %v702 = vrot.slane %v671, %v701
        %v703 = vmax.f32 %v702, %v266
        %v704 = vsub.f32 %v698, %v703
        %v705 = vmax.f32 %v704, 0.0
        %v706 = vlaneseq
        %v707 = vshrl.u32 %v706, 7
        %v708 = vsub.s32 0, %v707
        %v709 = vrot.slane %v690, %v708
        %v710 = vmin.f32 %v709, %v299
        %v711 = vlaneseq
        %v712 = vshrl.u32 %v711, 7
        %v713 = vsub.s32 0, %v712
        %v714 = vrot.slane %v676, %v713
        %v715 = vmax.f32 %v714, %v277
        %v716 = vsub.f32 %v710, %v715
        %v717 = vmax.f32 %v716, 0.0
        %v718 = vmul.f32 %v705, %v717
        %v719 = vlaneseq
        %v720 = vshrl.u32 %v719, 7
        %v721 = vsub.s32 0, %v720
        %v722 = vrot.slane %v693, %v721
        %v723 = vadd.f32 %v722, %v302
        %v724 = vsub.f32 %v723, %v718
        %v725 = vrcp.pop %v724
        %v726 = vmul.f32 %v718, %v725
        %s727 = scalar_lea.vmem %s225, 12
        %728 = vst [vmem:[%s727] sm:$0x1] %v671
        %729 = vst [vmem:[%s727 + $0x1] sm:$0x1] %v676
        %730 = vst [vmem:[%s727 + $0x2] sm:$0x1] %v683
        %731 = vst [vmem:[%s727 + $0x3] sm:$0x1] %v690
        %s732 = scalar_lea.vmem %s233, 12
        %733 = vst [vmem:[%s732] sm:$0x7] %v726
        %v735 = vrot.slane %v726, 7
        %vm737 = vcmp.gt.f32.partialorder %v726, %v735
        %v738 = vsel %vm737, %v726, %v735
        %v739 = vsel %vm737, %v266, %v350
        %v740 = vsel %vm737, %v277, %v354
        %v741 = vsel %vm737, %v288, %v358
        %v742 = vsel %vm737, %v299, %v362
        %v744 = vrot.slane %v738, 7
        %vm746 = vcmp.gt.f32.partialorder %v726, %v744
        %v748 = vrot.slane %v739, 7
        %v750 = vsel %vm746, %v266, %v748
        %v752 = vrot.slane %v740, 7
        %v754 = vsel %vm746, %v277, %v752
        %v756 = vrot.slane %v741, 7
        %v758 = vsel %vm746, %v288, %v756
        %v760 = vrot.slane %v742, 7
        %v762 = vsel %vm746, %v299, %v760
        %v763 = vadd.f32 %v750, %v758
        %v765 = vrot.slane %v671, 6
        %v767 = vsub.f32 %v763, %v765
        %v769 = vrot.slane %v683, 6
        %v771 = vsub.f32 %v767, %v769
        %v772 = vmul.f32 %v771, 0.5
        %v773 = vadd.f32 %v754, %v762
        %v775 = vrot.slane %v676, 6
        %v777 = vsub.f32 %v773, %v775
        %v779 = vrot.slane %v690, 6
        %v781 = vsub.f32 %v777, %v779
        %v782 = vmul.f32 %v781, 0.5
        %v783 = vsub.f32 %v758, %v750
        %v785 = vrot.slane %v691, 6
        %v787 = vsub.f32 %v783, %v785
        %v788 = vsub.f32 %v762, %v754
        %v790 = vrot.slane %v692, 6
        %v792 = vsub.f32 %v788, %v790
        %v793 = vmul.f32 %v772, 0.45
        %v795 = vrot.slane %v793, 2
        %v797 = vadd.f32 %v671, %v795
        %v798 = vmul.f32 %v782, 0.45
        %v800 = vrot.slane %v798, 2
        %v802 = vadd.f32 %v676, %v800
        %v803 = vadd.f32 %v683, %v795
        %v804 = vsub.f32 %v787, %v772
        %v805 = vmul.f32 %v804, 0.4
        %v807 = vrot.slane %v805, 2
        %v809 = vadd.f32 %v803, %v807
        %v810 = vadd.f32 %v690, %v800
        %v811 = vsub.f32 %v792, %v782
        %v812 = vmul.f32 %v811, 0.4
        %v814 = vrot.slane %v812, 2
        %v816 = vadd.f32 %v810, %v814
        %v817 = vsub.f32 %v809, %v797
        %v818 = vsub.f32 %v816, %v802
        %v819 = vmul.f32 %v817, %v818
        %v820 = vlaneseq
        %v821 = vshrl.u32 %v820, 7
        %v822 = vsub.s32 0, %v821
        %v823 = vrot.slane %v809, %v822
        %v824 = vmin.f32 %v823, %v288
        %v825 = vlaneseq
        %v826 = vshrl.u32 %v825, 7
        %v827 = vsub.s32 0, %v826
        %v828 = vrot.slane %v797, %v827
        %v829 = vmax.f32 %v828, %v266
        %v830 = vsub.f32 %v824, %v829
        %v831 = vmax.f32 %v830, 0.0
        %v832 = vlaneseq
        %v833 = vshrl.u32 %v832, 7
        %v834 = vsub.s32 0, %v833
        %v835 = vrot.slane %v816, %v834
        %v836 = vmin.f32 %v835, %v299
        %v837 = vlaneseq
        %v838 = vshrl.u32 %v837, 7
        %v839 = vsub.s32 0, %v838
        %v840 = vrot.slane %v802, %v839
        %v841 = vmax.f32 %v840, %v277
        %v842 = vsub.f32 %v836, %v841
        %v843 = vmax.f32 %v842, 0.0
        %v844 = vmul.f32 %v831, %v843
        %v845 = vlaneseq
        %v846 = vshrl.u32 %v845, 7
        %v847 = vsub.s32 0, %v846
        %v848 = vrot.slane %v819, %v847
        %v849 = vadd.f32 %v848, %v302
        %v850 = vsub.f32 %v849, %v844
        %v851 = vrcp.pop %v850
        %v852 = vmul.f32 %v844, %v851
        %s853 = scalar_lea.vmem %s225, 16
        %854 = vst [vmem:[%s853] sm:$0x1] %v797
        %855 = vst [vmem:[%s853 + $0x1] sm:$0x1] %v802
        %856 = vst [vmem:[%s853 + $0x2] sm:$0x1] %v809
        %857 = vst [vmem:[%s853 + $0x3] sm:$0x1] %v816
        %s858 = scalar_lea.vmem %s233, 16
        %859 = vst [vmem:[%s858] sm:$0x7] %v852
        %v861 = vrot.slane %v852, 7
        %vm863 = vcmp.gt.f32.partialorder %v852, %v861
        %v864 = vsel %vm863, %v852, %v861
        %v865 = vsel %vm863, %v266, %v350
        %v866 = vsel %vm863, %v277, %v354
        %v867 = vsel %vm863, %v288, %v358
        %v868 = vsel %vm863, %v299, %v362
        %v870 = vrot.slane %v864, 7
        %vm872 = vcmp.gt.f32.partialorder %v852, %v870
        %v874 = vrot.slane %v865, 7
        %v876 = vsel %vm872, %v266, %v874
        %v878 = vrot.slane %v866, 7
        %v880 = vsel %vm872, %v277, %v878
        %v882 = vrot.slane %v867, 7
        %v884 = vsel %vm872, %v288, %v882
        %v886 = vrot.slane %v868, 7
        %v888 = vsel %vm872, %v299, %v886
        %v889 = vadd.f32 %v876, %v884
        %v891 = vrot.slane %v797, 6
        %v893 = vsub.f32 %v889, %v891
        %v895 = vrot.slane %v809, 6
        %v897 = vsub.f32 %v893, %v895
        %v898 = vmul.f32 %v897, 0.5
        %v899 = vadd.f32 %v880, %v888
        %v901 = vrot.slane %v802, 6
        %v903 = vsub.f32 %v899, %v901
        %v905 = vrot.slane %v816, 6
        %v907 = vsub.f32 %v903, %v905
        %v908 = vmul.f32 %v907, 0.5
        %v909 = vsub.f32 %v884, %v876
        %v911 = vrot.slane %v817, 6
        %v913 = vsub.f32 %v909, %v911
        %v914 = vsub.f32 %v888, %v880
        %v916 = vrot.slane %v818, 6
        %v918 = vsub.f32 %v914, %v916
        %v919 = vmul.f32 %v898, 0.45
        %v921 = vrot.slane %v919, 2
        %v923 = vadd.f32 %v797, %v921
        %v924 = vmul.f32 %v908, 0.45
        %v926 = vrot.slane %v924, 2
        %v928 = vadd.f32 %v802, %v926
        %v929 = vadd.f32 %v809, %v921
        %v930 = vsub.f32 %v913, %v898
        %v931 = vmul.f32 %v930, 0.4
        %v933 = vrot.slane %v931, 2
        %v935 = vadd.f32 %v929, %v933
        %v936 = vadd.f32 %v816, %v926
        %v937 = vsub.f32 %v918, %v908
        %v938 = vmul.f32 %v937, 0.4
        %v940 = vrot.slane %v938, 2
        %v942 = vadd.f32 %v936, %v940
        %v943 = vsub.f32 %v935, %v923
        %v944 = vsub.f32 %v942, %v928
        %v945 = vmul.f32 %v943, %v944
        %v946 = vlaneseq
        %v947 = vshrl.u32 %v946, 7
        %v948 = vsub.s32 0, %v947
        %v949 = vrot.slane %v935, %v948
        %v950 = vmin.f32 %v949, %v288
        %v951 = vlaneseq
        %v952 = vshrl.u32 %v951, 7
        %v953 = vsub.s32 0, %v952
        %v954 = vrot.slane %v923, %v953
        %v955 = vmax.f32 %v954, %v266
        %v956 = vsub.f32 %v950, %v955
        %v957 = vmax.f32 %v956, 0.0
        %v958 = vlaneseq
        %v959 = vshrl.u32 %v958, 7
        %v960 = vsub.s32 0, %v959
        %v961 = vrot.slane %v942, %v960
        %v962 = vmin.f32 %v961, %v299
        %v963 = vlaneseq
        %v964 = vshrl.u32 %v963, 7
        %v965 = vsub.s32 0, %v964
        %v966 = vrot.slane %v928, %v965
        %v967 = vmax.f32 %v966, %v277
        %v968 = vsub.f32 %v962, %v967
        %v969 = vmax.f32 %v968, 0.0
        %v970 = vmul.f32 %v957, %v969
        %v971 = vlaneseq
        %v972 = vshrl.u32 %v971, 7
        %v973 = vsub.s32 0, %v972
        %v974 = vrot.slane %v945, %v973
        %v975 = vadd.f32 %v974, %v302
        %v976 = vsub.f32 %v975, %v970
        %v977 = vrcp.pop %v976
        %v978 = vmul.f32 %v970, %v977
        %s979 = scalar_lea.vmem %s225, 20
        %980 = vst [vmem:[%s979] sm:$0x1] %v923
        %981 = vst [vmem:[%s979 + $0x1] sm:$0x1] %v928
        %982 = vst [vmem:[%s979 + $0x2] sm:$0x1] %v935
        %983 = vst [vmem:[%s979 + $0x3] sm:$0x1] %v942
        %s984 = scalar_lea.vmem %s233, 20
        %985 = vst [vmem:[%s984] sm:$0x7] %v978
        %p986 = scmp.lt.s32.totalorder %s20, 1
        %s987 = scalar_select %p986, %s20, 1
        %p988 = scmp.lt.s32.totalorder %s21, 0
        %s989 = scalar_select %p988, %s21, 0
        %s990 = smul.addr %s987, 6
        %s991 = sadd.s32 %s989, %s990
        %s992 = smul.addr %s991, 4
        %s993 = scalar_lea.vmem %s2, %s992
        %p994 = scmp.lt.s32.totalorder %s20, 1
        %s995 = scalar_select %p994, %s20, 1
        %p996 = scmp.lt.s32.totalorder %s21, 0
        %s997 = scalar_select %p996, %s21, 0
        %s998 = smul.addr %s995, 6
        %s999 = sadd.s32 %s997, %s998
        %s1000 = smul.addr %s999, 4
        %s1001 = scalar_lea.vmem %s3, %s1000
        // Predicated region
        $region33: #{direct_vg_forward.1} parent=27 // pred_check
          %p1002 = pneg %p97
        $region34: #{direct_vg_forward.1} parent=27 // pred_check_branch
          %1004 = sbr.rel (%p1002) target = $region36
        $region35: #{direct_vg_forward.1} parent=27 // pred_region
          _
        $region36: #{direct_vg_forward.1} parent=27 // pred_fallthru
          _
        // Predicated region
        $region37: #{direct_vg_forward.1} parent=27 // pred_check
          %p1005 = pneg %p125
        $region38: #{direct_vg_forward.1} parent=27 // pred_check_branch
          %1007 = sbr.rel (%p1005) target = $region40
        $region39: #{direct_vg_forward.1} parent=27 // pred_region
          _
        $region40: #{direct_vg_forward.1} parent=27 // pred_fallthru
          _
      $region28: #{direct_vg_forward.1} parent=5 // pred_fallthru
        _
      %p1008 = scmp.le.s32.totalorder 2, %s11
      // Predicated region
      $region41: #{direct_vg_forward.1} parent=5 // pred_check
        %p1009 = pneg %p1008
      $region42: #{direct_vg_forward.1} parent=5 // pred_check_branch
        %1011 = sbr.rel (%p1009) target = $region44
      $region43: #{direct_vg_forward.1} parent=5 // pred_region
        %s1012 = ssub.s32 %s11, 2
        // Predicated region
        $region45: #{direct_vg_forward.1} parent=43 // pred_check
          %p1013 = pneg %p103
        $region46: #{direct_vg_forward.1} parent=43 // pred_check_branch
          %1015 = sbr.rel (%p1013) target = $region48
        $region47: #{direct_vg_forward.1} parent=43 // pred_region
          %p1016 = scmp.lt.s32.totalorder %s22, 1
          %s1017 = scalar_select %p1016, %s22, 1
          %p1018 = scmp.lt.s32.totalorder %s23, 0
          %s1019 = scalar_select %p1018, %s23, 0
          %s1020 = smul.addr %s1017, 6
          %s1021 = sadd.s32 %s1019, %s1020
          %s1022 = smul.addr %s1021, 4
          %s1023 = scalar_lea.vmem %s2, %s1022
        $region48: #{direct_vg_forward.1} parent=43 // pred_fallthru
          _
        // Predicated region
        $region49: #{direct_vg_forward.1} parent=43 // pred_check
          %p1024 = pneg %p131
        $region50: #{direct_vg_forward.1} parent=43 // pred_check_branch
          %1026 = sbr.rel (%p1024) target = $region52
        $region51: #{direct_vg_forward.1} parent=43 // pred_region
          %p1027 = scmp.lt.s32.totalorder %s22, 1
          %s1028 = scalar_select %p1027, %s22, 1
          %p1029 = scmp.lt.s32.totalorder %s23, 0
          %s1030 = scalar_select %p1029, %s23, 0
          %s1031 = smul.addr %s1028, 6
          %s1032 = sadd.s32 %s1030, %s1031
          %s1033 = smul.addr %s1032, 4
          %s1034 = scalar_lea.vmem %s3, %s1033
        $region52: #{direct_vg_forward.1} parent=43 // pred_fallthru
          _
      $region44: #{direct_vg_forward.1} parent=5 // pred_fallthru
        _
    $region6: #{direct_vg_forward.1} parent=1 // loop_footer
      %s15 = sadd.s32 1, %s11
    $region7: #{direct_vg_forward.1} parent=1 // loop_footer_branch
      %10 = sbr.rel target = $region3
    $region8: #{direct_vg_forward.1} parent=1 // loop_exit
      _
    %1035 = vsyncpa [#allocation3], 1
    %s1036 = scalar_lea.sflag [#allocation3], 1
    %1037 = vsyncpa %s1036, 1

</llo_original>
